<compile_context>
chip_gen: v6e
topology: v6e:2x2x1
jax: 0.10.0
libtpu: 0.0.40
codegen_flags: <defaults>
</compile_context>

<pallas_src>
import functools

import jax
import jax.numpy as jnp
from jax import lax
from jax.experimental import pallas as pl
from jax.experimental.pallas import tpu as pltpu

NPOSE = 24 * 6                     # 144
NSHAPE = 10
NCAM = 3
STATE = NPOSE + NSHAPE + NCAM      # 157
STATE_PAD = 256                    # lane-dense padded state width
FEAT = 512 * 4                     # 2048
IN_DIM = FEAT + STATE              # 2205
HIDDEN = 1024
N_ITER = 3


def _round_up(n, m):
    return ((n + m - 1) // m) * m


# ------------------------------- kernel --------------------------------------

def _regressor_kernel(x_ref, a_ref, s_ref, c_ref, state_in_ref, state_out_ref):
    # Affine fold: delta(state) = x @ A + state @ S + c.
    # x-part is iteration-invariant -> computed once per batch tile.
    delta_x = jnp.dot(x_ref[...], a_ref[...],
                      preferred_element_type=jnp.float32) + c_ref[...]
    state = state_in_ref[...]                    # (TB, 256) f32
    s = s_ref[...]                               # (256, 256) bf16
    for _ in range(N_ITER):                      # tiny static trip count, unrolled
        state = state + delta_x + jnp.dot(state.astype(jnp.bfloat16), s,
                                          preferred_element_type=jnp.float32)
    state_out_ref[...] = state


# --------------------------- one-time weight packing -------------------------

def pack_params(weights):
    """Model-load-time packing: compose the affine update in f32, cast once."""
    W1, b1, W2, b2, Wp, bp, Ws, bs, Wc, bc = [jnp.asarray(w, jnp.float32)
                                              for w in weights]
    hi = lax.Precision.HIGHEST
    Wd = jnp.concatenate([Wp, Ws, Wc], axis=1)                     # (1024, 157)
    bd = jnp.concatenate([bp, bs, bc], axis=1)                     # (1, 157)
    W2d = jnp.dot(W2, Wd, precision=hi)                            # (1024, 157)
    A = jnp.dot(W1[:FEAT], W2d, precision=hi)                      # (2048, 157)
    S = jnp.dot(W1[FEAT:], W2d, precision=hi)                      # (157, 157)
    c = jnp.dot(jnp.dot(b1, W2, precision=hi) + b2, Wd, precision=hi) + bd
    pad = STATE_PAD - STATE
    A = jnp.pad(A, ((0, 0), (0, pad))).astype(jnp.bfloat16)        # (2048, 256)
    S = jnp.pad(S, ((0, pad), (0, pad))).astype(jnp.bfloat16)      # (256, 256)
    c = jnp.pad(c, ((0, 0), (0, pad)))                             # (1, 256) f32
    return A, S, c


# --------------------------------- forward -----------------------------------

@functools.partial(jax.jit, static_argnames=("batch_tile",))
def regressor_forward(x, A, S, c, init_pose, init_shape, init_cam,
                      batch_tile=512):
    """Pallas forward of the Regressor refinement loop (eval mode).

    x: (B, 2048); A/S/c from pack_params(); init_* : (B,144)/(B,10)/(B,3).
    Returns (pred_pose, pred_shape, pred_cam).
    """
    B = x.shape[0]
    state0 = jnp.concatenate([init_pose, init_shape, init_cam], axis=1)
    state0 = jnp.pad(state0, ((0, 0), (0, STATE_PAD - STATE)))
    x = x.astype(jnp.bfloat16)                   # halve x DMA / VMEM

    # Batch tile: >= 2 grid steps for any non-tiny batch (v7x megacore sharding),
    # bounded padding waste when B is just above a tile boundary.
    if B <= 8:
        n_tiles = 1
    else:
        n_tiles = max(2, pl.cdiv(B, batch_tile))
    TB = min(_round_up(pl.cdiv(B, n_tiles), 8), batch_tile)
    Bp = _round_up(B, TB)
    if Bp != B:
        pad = Bp - B
        x = jnp.pad(x, ((0, pad), (0, 0)))       # fuses with the bf16 cast
        state0 = jnp.pad(state0, ((0, pad), (0, 0)))

    grid = (Bp // TB,)
    row_spec = lambda d: pl.BlockSpec((TB, d), lambda i: (i, 0))
    resident = pl.BlockSpec(memory_space=pltpu.MemorySpace.VMEM)   # no double-buffer

    state_out = pl.pallas_call(
        _regressor_kernel,
        out_shape=jax.ShapeDtypeStruct((Bp, STATE_PAD), jnp.float32),
        grid=grid,
        in_specs=[
            row_spec(FEAT),        # x tile (bf16)
            resident,              # A (2048, 256) bf16, whole-array in VMEM
            resident,              # S (256, 256)  bf16
            resident,              # c (1, 256)    f32
            row_spec(STATE_PAD),   # init state tile
        ],
        out_specs=row_spec(STATE_PAD),
        compiler_params=pltpu.CompilerParams(
            dimension_semantics=("parallel",),
            vmem_limit_bytes=48 * 1024 * 1024,
        ),
    )(x, A, S, c, state0)

    pred_pose = state_out[:B, :NPOSE]
    pred_shape = state_out[:B, NPOSE:NPOSE + NSHAPE]
    pred_cam = state_out[:B, NPOSE + NSHAPE:STATE]
    return pred_pose, pred_shape, pred_cam


# ----------------------- deterministic parameter setup -----------------------

def _xavier_uniform_T(key, in_dim, out_dim, gain=1.0):
    # (in, out) layout; xavier bound is symmetric in fan_in / fan_out
    bound = gain * (6.0 / (in_dim + out_dim)) ** 0.5
    return jax.random.uniform(key, (in_dim, out_dim), jnp.float32, -bound, bound)


def _linear_bias(key, in_dim, out_dim):
    bound = 1.0 / (in_dim ** 0.5)
    return jax.random.uniform(key, (1, out_dim), jnp.float32, -bound, bound)


def make_params(key):
    ks = jax.random.split(key, 10)
    W1 = _xavier_uniform_T(ks[0], IN_DIM, HIDDEN)
    b1 = _linear_bias(ks[1], IN_DIM, HIDDEN)
    W2 = _xavier_uniform_T(ks[2], HIDDEN, HIDDEN)
    b2 = _linear_bias(ks[3], HIDDEN, HIDDEN)
    Wp = _xavier_uniform_T(ks[4], HIDDEN, NPOSE, gain=0.01)
    bp = _linear_bias(ks[5], HIDDEN, NPOSE)
    Ws = _xavier_uniform_T(ks[6], HIDDEN, NSHAPE, gain=0.01)
    bs = _linear_bias(ks[7], HIDDEN, NSHAPE)
    Wc = _xavier_uniform_T(ks[8], HIDDEN, NCAM, gain=0.01)
    bc = _linear_bias(ks[9], HIDDEN, NCAM)
    return (W1, b1, W2, b2, Wp, bp, Ws, bs, Wc, bc)


def ref_forward_f32(x, weights, init_pose, init_shape, init_cam):
    """Pure-f32 per-layer reference matching the PyTorch eval-mode forward."""
    W1, b1, W2, b2, Wp, bp, Ws, bs, Wc, bc = weights
    hi = lax.Precision.HIGHEST
    pose, shape, cam = init_pose, init_shape, init_cam
    for _ in range(N_ITER):
        xc = jnp.concatenate([x, pose, shape, cam], axis=1)
        h = jnp.dot(xc, W1, precision=hi) + b1
        h = jnp.dot(h, W2, precision=hi) + b2
        pose = pose + jnp.dot(h, Wp, precision=hi) + bp
        shape = shape + jnp.dot(h, Ws, precision=hi) + bs
        cam = cam + jnp.dot(h, Wc, precision=hi) + bc
    return pose, shape, cam


if __name__ == "__main__":
    key = jax.random.PRNGKey(0)
    k_x, k_p, k_s, k_c, k_w = jax.random.split(key, 5)

    B = 2
    x = jax.random.normal(k_x, (B, FEAT), jnp.float32)

    # deterministic stand-ins for the smpl_mean_params buffers
    init_pose = jnp.broadcast_to(
        0.1 * jax.random.normal(k_p, (1, NPOSE), jnp.float32), (B, NPOSE))
    init_shape = jnp.broadcast_to(
        0.1 * jax.random.normal(k_s, (1, NSHAPE), jnp.float32), (B, NSHAPE))
    init_cam = jnp.broadcast_to(
        jnp.array([[0.9, 0.0, 0.0]], jnp.float32), (B, NCAM))

    weights = make_params(k_w)
    A, S, c = pack_params(weights)     # one-time, outside the jitted forward

    pose, shape, cam = regressor_forward(x, A, S, c,
                                         init_pose, init_shape, init_cam)
    jax.block_until_ready((pose, shape, cam))

    # Validate against the pure-f32 per-layer reference (bounds the absolute
    # error introduced by the bf16 affine fold).
    r_pose, r_shape, r_cam = ref_forward_f32(x, weights,
                                             init_pose, init_shape, init_cam)
    assert pose.shape == (B, NPOSE) and shape.shape == (B, NSHAPE) and cam.shape == (B, NCAM)
    assert jnp.allclose(pose, r_pose, atol=5e-3, rtol=1e-2)
    assert jnp.allclose(shape, r_shape, atol=5e-3, rtol=1e-2)
    assert jnp.allclose(cam, r_cam, atol=5e-3, rtol=1e-2)

    print("KERNEL_OK")
</pallas_src>

<mosaic_0001>
module attributes {stable_mosaic.version = 11 : i64} {
  func.func @_regressor_kernel(%arg0: i32, %arg1: memref<8x2048xbf16, #tpu.memory_space<vmem>>, %arg2: memref<2048x256xbf16, #tpu.memory_space<vmem>>, %arg3: memref<256x256xbf16, #tpu.memory_space<vmem>>, %arg4: memref<1x256xf32, #tpu.memory_space<vmem>>, %arg5: memref<8x256xf32, #tpu.memory_space<vmem>>, %arg6: memref<8x256xf32, #tpu.memory_space<vmem>>) attributes {dimension_semantics = [#tpu.dimension_semantics<parallel>], iteration_bounds = array<i64: 1>, scalar_prefetch = 0 : i64, scratch_operands = 0 : i64, tpu.core_type = #tpu.core_type<tc>, window_params = [{transform_indices = @transform_0, window_bounds = array<i64: 8, 2048>}, {pipeline_mode = #tpu.pipeline_mode<synchronous>, transform_indices = @transform_1, window_bounds = array<i64: 2048, 256>}, {pipeline_mode = #tpu.pipeline_mode<synchronous>, transform_indices = @transform_2, window_bounds = array<i64: 256, 256>}, {pipeline_mode = #tpu.pipeline_mode<synchronous>, transform_indices = @transform_3, window_bounds = array<i64: 1, 256>}, {transform_indices = @transform_4, window_bounds = array<i64: 8, 256>}, {transform_indices = @transform_5, window_bounds = array<i64: 8, 256>}]} {
    %c0 = arith.constant 0 : index
    %c0_0 = arith.constant 0 : index
    %0 = vector.load %arg1[%c0, %c0_0] : memref<8x2048xbf16, #tpu.memory_space<vmem>>, vector<8x2048xbf16>
    %c0_1 = arith.constant 0 : index
    %c0_2 = arith.constant 0 : index
    %1 = vector.load %arg2[%c0_1, %c0_2] : memref<2048x256xbf16, #tpu.memory_space<vmem>>, vector<2048x256xbf16>
    %cst = arith.constant dense<0.000000e+00> : vector<8x256xf32>
    %2 = tpu.matmul %0, %1, %cst {dimension_numbers = #tpu.dot_dimension_numbers<[1], [0], [0], [1], [0, 0, 1, 1], [], []>} : vector<8x2048xbf16>, vector<2048x256xbf16>, vector<8x256xf32> -> vector<8x256xf32>
    %c0_3 = arith.constant 0 : index
    %c0_4 = arith.constant 0 : index
    %3 = vector.load %arg4[%c0_3, %c0_4] : memref<1x256xf32, #tpu.memory_space<vmem>>, vector<1x256xf32>
    %4 = vector.broadcast %3 : vector<1x256xf32> to vector<8x256xf32>
    %5 = arith.addf %2, %4 : vector<8x256xf32>
    %c0_5 = arith.constant 0 : index
    %c0_6 = arith.constant 0 : index
    %6 = vector.load %arg5[%c0_5, %c0_6] : memref<8x256xf32, #tpu.memory_space<vmem>>, vector<8x256xf32>
    %c0_7 = arith.constant 0 : index
    %c0_8 = arith.constant 0 : index
    %7 = vector.load %arg3[%c0_7, %c0_8] : memref<256x256xbf16, #tpu.memory_space<vmem>>, vector<256x256xbf16>
    %8 = arith.addf %6, %5 : vector<8x256xf32>
    %9 = arith.truncf %6 : vector<8x256xf32> to vector<8x256xbf16>
    %cst_9 = arith.constant dense<0.000000e+00> : vector<8x256xf32>
    %10 = tpu.matmul %9, %7, %cst_9 {dimension_numbers = #tpu.dot_dimension_numbers<[1], [0], [0], [1], [0, 0, 1, 1], [], []>} : vector<8x256xbf16>, vector<256x256xbf16>, vector<8x256xf32> -> vector<8x256xf32>
    %11 = arith.addf %8, %10 : vector<8x256xf32>
    %12 = arith.addf %11, %5 : vector<8x256xf32>
    %13 = arith.truncf %11 : vector<8x256xf32> to vector<8x256xbf16>
    %cst_10 = arith.constant dense<0.000000e+00> : vector<8x256xf32>
    %14 = tpu.matmul %13, %7, %cst_10 {dimension_numbers = #tpu.dot_dimension_numbers<[1], [0], [0], [1], [0, 0, 1, 1], [], []>} : vector<8x256xbf16>, vector<256x256xbf16>, vector<8x256xf32> -> vector<8x256xf32>
    %15 = arith.addf %12, %14 : vector<8x256xf32>
    %16 = arith.addf %15, %5 : vector<8x256xf32>
    %17 = arith.truncf %15 : vector<8x256xf32> to vector<8x256xbf16>
    %cst_11 = arith.constant dense<0.000000e+00> : vector<8x256xf32>
    %18 = tpu.matmul %17, %7, %cst_11 {dimension_numbers = #tpu.dot_dimension_numbers<[1], [0], [0], [1], [0, 0, 1, 1], [], []>} : vector<8x256xbf16>, vector<256x256xbf16>, vector<8x256xf32> -> vector<8x256xf32>
    %19 = arith.addf %16, %18 : vector<8x256xf32>
    %c0_12 = arith.constant 0 : index
    %c0_13 = arith.constant 0 : index
    %20 = vector.load %arg6[%c0_12, %c0_13] : memref<8x256xf32, #tpu.memory_space<vmem>>, vector<8x256xf32>
    tpu.vector_store %arg6[%c0_12, %c0_13], %19 {strides = array<i32>} : memref<8x256xf32, #tpu.memory_space<vmem>>, vector<8x256xf32>,
    return
  }
  func.func @transform_0(%arg0: i32) -> (i32, i32) {
    %c0_i32 = arith.constant 0 : i32
    %c0_i32_0 = arith.constant 0 : i32
    return %arg0, %c0_i32 : i32, i32
  }
  func.func @transform_1(%arg0: i32) -> (i32, i32) {
    %c0_i32 = arith.constant 0 : i32
    %c0_i32_0 = arith.constant 0 : i32
    %c0_i32_1 = arith.constant 0 : i32
    return %c0_i32, %c0_i32_0 : i32, i32
  }
  func.func @transform_2(%arg0: i32) -> (i32, i32) {
    %c0_i32 = arith.constant 0 : i32
    %c0_i32_0 = arith.constant 0 : i32
    %c0_i32_1 = arith.constant 0 : i32
    return %c0_i32, %c0_i32_0 : i32, i32
  }
  func.func @transform_3(%arg0: i32) -> (i32, i32) {
    %c0_i32 = arith.constant 0 : i32
    %c0_i32_0 = arith.constant 0 : i32
    %c0_i32_1 = arith.constant 0 : i32
    return %c0_i32, %c0_i32_0 : i32, i32
  }
  func.func @transform_4(%arg0: i32) -> (i32, i32) {
    %c0_i32 = arith.constant 0 : i32
    %c0_i32_0 = arith.constant 0 : i32
    return %arg0, %c0_i32 : i32, i32
  }
  func.func @transform_5(%arg0: i32) -> (i32, i32) {
    %c0_i32 = arith.constant 0 : i32
    %c0_i32_0 = arith.constant 0 : i32
    return %arg0, %c0_i32 : i32, i32
  }
}

</mosaic_0001>

<llo_original>
// kernel: regressor_forward.1
$region0: #{regressor_forward.1}
  #allocation0 [shape = 'u32[]', space=smem, size = 0x4, offset = 0x4, fixed_abs, tag = 'smem constant byte address 0x4 - core index']
  #allocation1 [shape = 'u32[144,128]{1,0:T(1,128)}', space=vmem, size = 0x12000, scoped, tag = 'internal scratch']
  %s0 = inlined_call_operand.vmem [shape: bf16[8,2048], index: 0, kind: input, shape index: {}]
  %s1 = inlined_call_operand.hbm [shape: bf16[2048,256], index: 1, kind: input, shape index: {}]
  %s2 = inlined_call_operand.hbm [shape: bf16[256,256], index: 2, kind: input, shape index: {}]
  %s3 = inlined_call_operand.vmem [shape: f32[1,256], index: 3, kind: input, shape index: {}]
  %s4 = inlined_call_operand.vmem [shape: f32[8,256], index: 4, kind: input, shape index: {}]
  %s5 = inlined_call_operand.vmem [shape: f32[8,256], index: 5, kind: output, shape index: {}]
  %s6 = sld [smem:[#allocation0]]
  $region38: #{regressor_forward.1} parent=0
    _
  %s8 = ssub.s32 1, %s6
  %s9 = scalar_select 0, %s8, %s6
  $region1: #{regressor_forward.1} parent=0
    #allocation2 [shape = 'u8[1048576]{0}', space=vmem, size = 0x100000, scoped, tag = 'input window, operand 1, single buffered']
    #allocation3 [shape = 's32[1]{0}', space=sflag, size = 0x4, scoped, tag = 'scoped memory for regressor_forward.1']
    #allocation4 [shape = 'u8[131072]{0}', space=vmem, size = 0x20000, scoped, tag = 'input window, operand 2, single buffered']
    #allocation5 [shape = 's32[1]{0}', space=sflag, size = 0x4, scoped, tag = 'scoped memory for regressor_forward.1']
    %10 = vsyncpa [#allocation3], 0
    %11 = vsyncpa [#allocation5], 0
    // Predicated region
    $region2: #{regressor_forward.1} parent=1 // pred_check
      _
    $region3: #{regressor_forward.1} parent=1 // pred_check_branch
      %13 = sbr.rel (0) target = $region5
    $region4: #{regressor_forward.1} parent=1 // pred_region
      _
    $region5: #{regressor_forward.1} parent=1 // pred_fallthru
      _
    // Predicated region
    $region6: #{regressor_forward.1} parent=1 // pred_check
      _
    $region7: #{regressor_forward.1} parent=1 // pred_check_branch
      %15 = sbr.rel (0) target = $region9
    $region8: #{regressor_forward.1} parent=1 // pred_region
      %s17 = ssub.s32 32768, 32768
      %18 = vsyncadd [#allocation3], %s17
      %s19 = sshll.u32 [#allocation2], 4
      %s20 = int_to_ptr.vmem [resolvable:$true] %s19
      %25 = dma.hbm_to_vmem [thread:$0]  %s1, 32768, %s20, [#allocation3], 128, 128, 8
    $region9: #{regressor_forward.1} parent=1 // pred_fallthru
      _
    // Predicated region
    $region10: #{regressor_forward.1} parent=1 // pred_check
      _
    $region11: #{regressor_forward.1} parent=1 // pred_check_branch
      %27 = sbr.rel (0) target = $region13
    $region12: #{regressor_forward.1} parent=1 // pred_region
      %s29 = ssub.s32 4096, 4096
      %30 = vsyncadd [#allocation5], %s29
      %s31 = sshll.u32 [#allocation4], 4
      %s32 = int_to_ptr.vmem [resolvable:$true] %s31
      %37 = dma.hbm_to_vmem [thread:$0]  %s2, 4096, %s32, [#allocation5], 128, 128, 8
    $region13: #{regressor_forward.1} parent=1 // pred_fallthru
      _
    // Predicated region
    $region14: #{regressor_forward.1} parent=1 // pred_check
      _
    $region15: #{regressor_forward.1} parent=1 // pred_check_branch
      %39 = sbr.rel (0) target = $region17
    $region16: #{regressor_forward.1} parent=1 // pred_region
      _
    $region17: #{regressor_forward.1} parent=1 // pred_fallthru
      _
    // Predicated region
    $region18: #{regressor_forward.1} parent=1 // pred_check
      _
    $region19: #{regressor_forward.1} parent=1 // pred_check_branch
      %41 = sbr.rel (0) target = $region21
    $region20: #{regressor_forward.1} parent=1 // pred_region
      _
    $region21: #{regressor_forward.1} parent=1 // pred_fallthru
      _
    // Predicated region
    $region22: #{regressor_forward.1} parent=1 // pred_check
      _
    $region23: #{regressor_forward.1} parent=1 // pred_check_branch
      %43 = sbr.rel (0) target = $region25
    $region24: #{regressor_forward.1} parent=1 // pred_region
      %44 = dma.done [#allocation3], 32768
    $region25: #{regressor_forward.1} parent=1 // pred_fallthru
      _
    // Predicated region
    $region26: #{regressor_forward.1} parent=1 // pred_check
      _
    $region27: #{regressor_forward.1} parent=1 // pred_check_branch
      %46 = sbr.rel (0) target = $region29
    $region28: #{regressor_forward.1} parent=1 // pred_region
      %47 = dma.done [#allocation5], 4096
    $region29: #{regressor_forward.1} parent=1 // pred_fallthru
      _
    %v48 = vld [vmem:[%s0] sm:$0xff]
    %v49 = vld [vmem:[%s0 + $0x8] sm:$0xff]
    %v50 = vld [vmem:[%s0 + $0x10] sm:$0xff]
    %v51 = vld [vmem:[%s0 + $0x18] sm:$0xff]
    %v52 = vld [vmem:[%s0 + $0x20] sm:$0xff]
    %v53 = vld [vmem:[%s0 + $0x28] sm:$0xff]
    %v54 = vld [vmem:[%s0 + $0x30] sm:$0xff]
    %v55 = vld [vmem:[%s0 + $0x38] sm:$0xff]
    %v56 = vld [vmem:[#allocation2] sm:$0xff]
    %v57 = vld [vmem:[#allocation2 + $0x8] sm:$0xff]
    %v58 = vld [vmem:[#allocation2 + $0x10] sm:$0xff]
    %v59 = vld [vmem:[#allocation2 + $0x18] sm:$0xff]
    %v60 = vld [vmem:[#allocation2 + $0x20] sm:$0xff]
    %v61 = vld [vmem:[#allocation2 + $0x28] sm:$0xff]
    %v62 = vld [vmem:[#allocation2 + $0x30] sm:$0xff]
    %v63 = vld [vmem:[#allocation2 + $0x38] sm:$0xff]
    %v64 = vld [vmem:[#allocation2 + $0x40] sm:$0xff]
    %v65 = vld [vmem:[#allocation2 + $0x48] sm:$0xff]
    %v66 = vld [vmem:[#allocation2 + $0x50] sm:$0xff]
    %v67 = vld [vmem:[#allocation2 + $0x58] sm:$0xff]
    %v68 = vld [vmem:[#allocation2 + $0x60] sm:$0xff]
    %v69 = vld [vmem:[#allocation2 + $0x68] sm:$0xff]
    %v70 = vld [vmem:[#allocation2 + $0x70] sm:$0xff]
    %v71 = vld [vmem:[#allocation2 + $0x78] sm:$0xff]
    %v72 = vld [vmem:[#allocation2 + $0x80] sm:$0xff]
    %v73 = vld [vmem:[#allocation2 + $0x88] sm:$0xff]
    %v74 = vld [vmem:[#allocation2 + $0x90] sm:$0xff]
    %v75 = vld [vmem:[#allocation2 + $0x98] sm:$0xff]
    %v76 = vld [vmem:[#allocation2 + $0xa0] sm:$0xff]
    %v77 = vld [vmem:[#allocation2 + $0xa8] sm:$0xff]
    %v78 = vld [vmem:[#allocation2 + $0xb0] sm:$0xff]
    %v79 = vld [vmem:[#allocation2 + $0xb8] sm:$0xff]
    %v80 = vld [vmem:[#allocation2 + $0xc0] sm:$0xff]
    %v81 = vld [vmem:[#allocation2 + $0xc8] sm:$0xff]
    %v82 = vld [vmem:[#allocation2 + $0xd0] sm:$0xff]
    %v83 = vld [vmem:[#allocation2 + $0xd8] sm:$0xff]
    %v84 = vld [vmem:[#allocation2 + $0xe0] sm:$0xff]
    %v85 = vld [vmem:[#allocation2 + $0xe8] sm:$0xff]
    %v86 = vld [vmem:[#allocation2 + $0xf0] sm:$0xff]
    %v87 = vld [vmem:[#allocation2 + $0xf8] sm:$0xff]
    %v88 = vld [vmem:[#allocation2 + $0x100] sm:$0xff]
    %v89 = vld [vmem:[#allocation2 + $0x108] sm:$0xff]
    %v90 = vld [vmem:[#allocation2 + $0x110] sm:$0xff]
    %v91 = vld [vmem:[#allocation2 + $0x118] sm:$0xff]
    %v92 = vld [vmem:[#allocation2 + $0x120] sm:$0xff]
    %v93 = vld [vmem:[#allocation2 + $0x128] sm:$0xff]
    %v94 = vld [vmem:[#allocation2 + $0x130] sm:$0xff]
    %v95 = vld [vmem:[#allocation2 + $0x138] sm:$0xff]
    %v96 = vld [vmem:[#allocation2 + $0x140] sm:$0xff]
    %v97 = vld [vmem:[#allocation2 + $0x148] sm:$0xff]
    %v98 = vld [vmem:[#allocation2 + $0x150] sm:$0xff]
    %v99 = vld [vmem:[#allocation2 + $0x158] sm:$0xff]
    %v100 = vld [vmem:[#allocation2 + $0x160] sm:$0xff]
    %v101 = vld [vmem:[#allocation2 + $0x168] sm:$0xff]
    %v102 = vld [vmem:[#allocation2 + $0x170] sm:$0xff]
    %v103 = vld [vmem:[#allocation2 + $0x178] sm:$0xff]
    %v104 = vld [vmem:[#allocation2 + $0x180] sm:$0xff]
    %v105 = vld [vmem:[#allocation2 + $0x188] sm:$0xff]
    %v106 = vld [vmem:[#allocation2 + $0x190] sm:$0xff]
    %v107 = vld [vmem:[#allocation2 + $0x198] sm:$0xff]
    %v108 = vld [vmem:[#allocation2 + $0x1a0] sm:$0xff]
    %v109 = vld [vmem:[#allocation2 + $0x1a8] sm:$0xff]
    %v110 = vld [vmem:[#allocation2 + $0x1b0] sm:$0xff]
    %v111 = vld [vmem:[#allocation2 + $0x1b8] sm:$0xff]
    %v112 = vld [vmem:[#allocation2 + $0x1c0] sm:$0xff]
    %v113 = vld [vmem:[#allocation2 + $0x1c8] sm:$0xff]
    %v114 = vld [vmem:[#allocation2 + $0x1d0] sm:$0xff]
    %v115 = vld [vmem:[#allocation2 + $0x1d8] sm:$0xff]
    %v116 = vld [vmem:[#allocation2 + $0x1e0] sm:$0xff]
    %v117 = vld [vmem:[#allocation2 + $0x1e8] sm:$0xff]
    %v118 = vld [vmem:[#allocation2 + $0x1f0] sm:$0xff]
    %v119 = vld [vmem:[#allocation2 + $0x1f8] sm:$0xff]
    %v120 = vld [vmem:[#allocation2 + $0x200] sm:$0xff]
    %v121 = vld [vmem:[#allocation2 + $0x208] sm:$0xff]
    %v122 = vld [vmem:[#allocation2 + $0x210] sm:$0xff]
    %v123 = vld [vmem:[#allocation2 + $0x218] sm:$0xff]
    %v124 = vld [vmem:[#allocation2 + $0x220] sm:$0xff]
    %v125 = vld [vmem:[#allocation2 + $0x228] sm:$0xff]
    %v126 = vld [vmem:[#allocation2 + $0x230] sm:$0xff]
    %v127 = vld [vmem:[#allocation2 + $0x238] sm:$0xff]
    %v128 = vld [vmem:[#allocation2 + $0x240] sm:$0xff]
    %v129 = vld [vmem:[#allocation2 + $0x248] sm:$0xff]
    %v130 = vld [vmem:[#allocation2 + $0x250] sm:$0xff]
    %v131 = vld [vmem:[#allocation2 + $0x258] sm:$0xff]
    %v132 = vld [vmem:[#allocation2 + $0x260] sm:$0xff]
    %v133 = vld [vmem:[#allocation2 + $0x268] sm:$0xff]
    %v134 = vld [vmem:[#allocation2 + $0x270] sm:$0xff]
    %v135 = vld [vmem:[#allocation2 + $0x278] sm:$0xff]
    %v136 = vld [vmem:[#allocation2 + $0x280] sm:$0xff]
    %v137 = vld [vmem:[#allocation2 + $0x288] sm:$0xff]
    %v138 = vld [vmem:[#allocation2 + $0x290] sm:$0xff]
    %v139 = vld [vmem:[#allocation2 + $0x298] sm:$0xff]
    %v140 = vld [vmem:[#allocation2 + $0x2a0] sm:$0xff]
    %v141 = vld [vmem:[#allocation2 + $0x2a8] sm:$0xff]
    %v142 = vld [vmem:[#allocation2 + $0x2b0] sm:$0xff]
    %v143 = vld [vmem:[#allocation2 + $0x2b8] sm:$0xff]
    %v144 = vld [vmem:[#allocation2 + $0x2c0] sm:$0xff]
    %v145 = vld [vmem:[#allocation2 + $0x2c8] sm:$0xff]
    %v146 = vld [vmem:[#allocation2 + $0x2d0] sm:$0xff]
    %v147 = vld [vmem:[#allocation2 + $0x2d8] sm:$0xff]
    %v148 = vld [vmem:[#allocation2 + $0x2e0] sm:$0xff]
    %v149 = vld [vmem:[#allocation2 + $0x2e8] sm:$0xff]
    %v150 = vld [vmem:[#allocation2 + $0x2f0] sm:$0xff]
    %v151 = vld [vmem:[#allocation2 + $0x2f8] sm:$0xff]
    %v152 = vld [vmem:[#allocation2 + $0x300] sm:$0xff]
    %v153 = vld [vmem:[#allocation2 + $0x308] sm:$0xff]
    %v154 = vld [vmem:[#allocation2 + $0x310] sm:$0xff]
    %v155 = vld [vmem:[#allocation2 + $0x318] sm:$0xff]
    %v156 = vld [vmem:[#allocation2 + $0x320] sm:$0xff]
    %v157 = vld [vmem:[#allocation2 + $0x328] sm:$0xff]
    %v158 = vld [vmem:[#allocation2 + $0x330] sm:$0xff]
    %v159 = vld [vmem:[#allocation2 + $0x338] sm:$0xff]
    %v160 = vld [vmem:[#allocation2 + $0x340] sm:$0xff]
    %v161 = vld [vmem:[#allocation2 + $0x348] sm:$0xff]
    %v162 = vld [vmem:[#allocation2 + $0x350] sm:$0xff]
    %v163 = vld [vmem:[#allocation2 + $0x358] sm:$0xff]
    %v164 = vld [vmem:[#allocation2 + $0x360] sm:$0xff]
    %v165 = vld [vmem:[#allocation2 + $0x368] sm:$0xff]
    %v166 = vld [vmem:[#allocation2 + $0x370] sm:$0xff]
    %v167 = vld [vmem:[#allocation2 + $0x378] sm:$0xff]
    %v168 = vld [vmem:[#allocation2 + $0x380] sm:$0xff]
    %v169 = vld [vmem:[#allocation2 + $0x388] sm:$0xff]
    %v170 = vld [vmem:[#allocation2 + $0x390] sm:$0xff]
    %v171 = vld [vmem:[#allocation2 + $0x398] sm:$0xff]
    %v172 = vld [vmem:[#allocation2 + $0x3a0] sm:$0xff]
    %v173 = vld [vmem:[#allocation2 + $0x3a8] sm:$0xff]
    %v174 = vld [vmem:[#allocation2 + $0x3b0] sm:$0xff]
    %v175 = vld [vmem:[#allocation2 + $0x3b8] sm:$0xff]
    %v176 = vld [vmem:[#allocation2 + $0x3c0] sm:$0xff]
    %v177 = vld [vmem:[#allocation2 + $0x3c8] sm:$0xff]
    %v178 = vld [vmem:[#allocation2 + $0x3d0] sm:$0xff]
    %v179 = vld [vmem:[#allocation2 + $0x3d8] sm:$0xff]
    %v180 = vld [vmem:[#allocation2 + $0x3e0] sm:$0xff]
    %v181 = vld [vmem:[#allocation2 + $0x3e8] sm:$0xff]
    %v182 = vld [vmem:[#allocation2 + $0x3f0] sm:$0xff]
    %v183 = vld [vmem:[#allocation2 + $0x3f8] sm:$0xff]
    %v184 = vld [vmem:[#allocation2 + $0x400] sm:$0xff]
    %v185 = vld [vmem:[#allocation2 + $0x408] sm:$0xff]
    %v186 = vld [vmem:[#allocation2 + $0x410] sm:$0xff]
    %v187 = vld [vmem:[#allocation2 + $0x418] sm:$0xff]
    %v188 = vld [vmem:[#allocation2 + $0x420] sm:$0xff]
    %v189 = vld [vmem:[#allocation2 + $0x428] sm:$0xff]
    %v190 = vld [vmem:[#allocation2 + $0x430] sm:$0xff]
    %v191 = vld [vmem:[#allocation2 + $0x438] sm:$0xff]
    %v192 = vld [vmem:[#allocation2 + $0x440] sm:$0xff]
    %v193 = vld [vmem:[#allocation2 + $0x448] sm:$0xff]
    %v194 = vld [vmem:[#allocation2 + $0x450] sm:$0xff]
    %v195 = vld [vmem:[#allocation2 + $0x458] sm:$0xff]
    %v196 = vld [vmem:[#allocation2 + $0x460] sm:$0xff]
    %v197 = vld [vmem:[#allocation2 + $0x468] sm:$0xff]
    %v198 = vld [vmem:[#allocation2 + $0x470] sm:$0xff]
    %v199 = vld [vmem:[#allocation2 + $0x478] sm:$0xff]
    %v200 = vld [vmem:[#allocation2 + $0x480] sm:$0xff]
    %v201 = vld [vmem:[#allocation2 + $0x488] sm:$0xff]
    %v202 = vld [vmem:[#allocation2 + $0x490] sm:$0xff]
    %v203 = vld [vmem:[#allocation2 + $0x498] sm:$0xff]
    %v204 = vld [vmem:[#allocation2 + $0x4a0] sm:$0xff]
    %v205 = vld [vmem:[#allocation2 + $0x4a8] sm:$0xff]
    %v206 = vld [vmem:[#allocation2 + $0x4b0] sm:$0xff]
    %v207 = vld [vmem:[#allocation2 + $0x4b8] sm:$0xff]
    %v208 = vld [vmem:[#allocation2 + $0x4c0] sm:$0xff]
    %v209 = vld [vmem:[#allocation2 + $0x4c8] sm:$0xff]
    %v210 = vld [vmem:[#allocation2 + $0x4d0] sm:$0xff]
    %v211 = vld [vmem:[#allocation2 + $0x4d8] sm:$0xff]
    %v212 = vld [vmem:[#allocation2 + $0x4e0] sm:$0xff]
    %v213 = vld [vmem:[#allocation2 + $0x4e8] sm:$0xff]
    %v214 = vld [vmem:[#allocation2 + $0x4f0] sm:$0xff]
    %v215 = vld [vmem:[#allocation2 + $0x4f8] sm:$0xff]
    %v216 = vld [vmem:[#allocation2 + $0x500] sm:$0xff]
    %v217 = vld [vmem:[#allocation2 + $0x508] sm:$0xff]
    %v218 = vld [vmem:[#allocation2 + $0x510] sm:$0xff]
    %v219 = vld [vmem:[#allocation2 + $0x518] sm:$0xff]
    %v220 = vld [vmem:[#allocation2 + $0x520] sm:$0xff]
    %v221 = vld [vmem:[#allocation2 + $0x528] sm:$0xff]
    %v222 = vld [vmem:[#allocation2 + $0x530] sm:$0xff]
    %v223 = vld [vmem:[#allocation2 + $0x538] sm:$0xff]
    %v224 = vld [vmem:[#allocation2 + $0x540] sm:$0xff]
    %v225 = vld [vmem:[#allocation2 + $0x548] sm:$0xff]
    %v226 = vld [vmem:[#allocation2 + $0x550] sm:$0xff]
    %v227 = vld [vmem:[#allocation2 + $0x558] sm:$0xff]
    %v228 = vld [vmem:[#allocation2 + $0x560] sm:$0xff]
    %v229 = vld [vmem:[#allocation2 + $0x568] sm:$0xff]
    %v230 = vld [vmem:[#allocation2 + $0x570] sm:$0xff]
    %v231 = vld [vmem:[#allocation2 + $0x578] sm:$0xff]
    %v232 = vld [vmem:[#allocation2 + $0x580] sm:$0xff]
    %v233 = vld [vmem:[#allocation2 + $0x588] sm:$0xff]
    %v234 = vld [vmem:[#allocation2 + $0x590] sm:$0xff]
    %v235 = vld [vmem:[#allocation2 + $0x598] sm:$0xff]
    %v236 = vld [vmem:[#allocation2 + $0x5a0] sm:$0xff]
    %v237 = vld [vmem:[#allocation2 + $0x5a8] sm:$0xff]
    %v238 = vld [vmem:[#allocation2 + $0x5b0] sm:$0xff]
    %v239 = vld [vmem:[#allocation2 + $0x5b8] sm:$0xff]
    %v240 = vld [vmem:[#allocation2 + $0x5c0] sm:$0xff]
    %v241 = vld [vmem:[#allocation2 + $0x5c8] sm:$0xff]
    %v242 = vld [vmem:[#allocation2 + $0x5d0] sm:$0xff]
    %v243 = vld [vmem:[#allocation2 + $0x5d8] sm:$0xff]
    %v244 = vld [vmem:[#allocation2 + $0x5e0] sm:$0xff]
    %v245 = vld [vmem:[#allocation2 + $0x5e8] sm:$0xff]
    %v246 = vld [vmem:[#allocation2 + $0x5f0] sm:$0xff]
    %v247 = vld [vmem:[#allocation2 + $0x5f8] sm:$0xff]
    %v248 = vld [vmem:[#allocation2 + $0x600] sm:$0xff]
    %v249 = vld [vmem:[#allocation2 + $0x608] sm:$0xff]
    %v250 = vld [vmem:[#allocation2 + $0x610] sm:$0xff]
    %v251 = vld [vmem:[#allocation2 + $0x618] sm:$0xff]
    %v252 = vld [vmem:[#allocation2 + $0x620] sm:$0xff]
    %v253 = vld [vmem:[#allocation2 + $0x628] sm:$0xff]
    %v254 = vld [vmem:[#allocation2 + $0x630] sm:$0xff]
    %v255 = vld [vmem:[#allocation2 + $0x638] sm:$0xff]
    %v256 = vld [vmem:[#allocation2 + $0x640] sm:$0xff]
    %v257 = vld [vmem:[#allocation2 + $0x648] sm:$0xff]
    %v258 = vld [vmem:[#allocation2 + $0x650] sm:$0xff]
    %v259 = vld [vmem:[#allocation2 + $0x658] sm:$0xff]
    %v260 = vld [vmem:[#allocation2 + $0x660] sm:$0xff]
    %v261 = vld [vmem:[#allocation2 + $0x668] sm:$0xff]
    %v262 = vld [vmem:[#allocation2 + $0x670] sm:$0xff]
    %v263 = vld [vmem:[#allocation2 + $0x678] sm:$0xff]
    %v264 = vld [vmem:[#allocation2 + $0x680] sm:$0xff]
    %v265 = vld [vmem:[#allocation2 + $0x688] sm:$0xff]
    %v266 = vld [vmem:[#allocation2 + $0x690] sm:$0xff]
    %v267 = vld [vmem:[#allocation2 + $0x698] sm:$0xff]
    %v268 = vld [vmem:[#allocation2 + $0x6a0] sm:$0xff]
    %v269 = vld [vmem:[#allocation2 + $0x6a8] sm:$0xff]
    %v270 = vld [vmem:[#allocation2 + $0x6b0] sm:$0xff]
    %v271 = vld [vmem:[#allocation2 + $0x6b8] sm:$0xff]
    %v272 = vld [vmem:[#allocation2 + $0x6c0] sm:$0xff]
    %v273 = vld [vmem:[#allocation2 + $0x6c8] sm:$0xff]
    %v274 = vld [vmem:[#allocation2 + $0x6d0] sm:$0xff]
    %v275 = vld [vmem:[#allocation2 + $0x6d8] sm:$0xff]
    %v276 = vld [vmem:[#allocation2 + $0x6e0] sm:$0xff]
    %v277 = vld [vmem:[#allocation2 + $0x6e8] sm:$0xff]
    %v278 = vld [vmem:[#allocation2 + $0x6f0] sm:$0xff]
    %v279 = vld [vmem:[#allocation2 + $0x6f8] sm:$0xff]
    %v280 = vld [vmem:[#allocation2 + $0x700] sm:$0xff]
    %v281 = vld [vmem:[#allocation2 + $0x708] sm:$0xff]
    %v282 = vld [vmem:[#allocation2 + $0x710] sm:$0xff]
    %v283 = vld [vmem:[#allocation2 + $0x718] sm:$0xff]
    %v284 = vld [vmem:[#allocation2 + $0x720] sm:$0xff]
    %v285 = vld [vmem:[#allocation2 + $0x728] sm:$0xff]
    %v286 = vld [vmem:[#allocation2 + $0x730] sm:$0xff]
    %v287 = vld [vmem:[#allocation2 + $0x738] sm:$0xff]
    %v288 = vld [vmem:[#allocation2 + $0x740] sm:$0xff]
    %v289 = vld [vmem:[#allocation2 + $0x748] sm:$0xff]
    %v290 = vld [vmem:[#allocation2 + $0x750] sm:$0xff]
    %v291 = vld [vmem:[#allocation2 + $0x758] sm:$0xff]
    %v292 = vld [vmem:[#allocation2 + $0x760] sm:$0xff]
    %v293 = vld [vmem:[#allocation2 + $0x768] sm:$0xff]
    %v294 = vld [vmem:[#allocation2 + $0x770] sm:$0xff]
    %v295 = vld [vmem:[#allocation2 + $0x778] sm:$0xff]
    %v296 = vld [vmem:[#allocation2 + $0x780] sm:$0xff]
    %v297 = vld [vmem:[#allocation2 + $0x788] sm:$0xff]
    %v298 = vld [vmem:[#allocation2 + $0x790] sm:$0xff]
    %v299 = vld [vmem:[#allocation2 + $0x798] sm:$0xff]
    %v300 = vld [vmem:[#allocation2 + $0x7a0] sm:$0xff]
    %v301 = vld [vmem:[#allocation2 + $0x7a8] sm:$0xff]
    %v302 = vld [vmem:[#allocation2 + $0x7b0] sm:$0xff]
    %v303 = vld [vmem:[#allocation2 + $0x7b8] sm:$0xff]
    %v304 = vld [vmem:[#allocation2 + $0x7c0] sm:$0xff]
    %v305 = vld [vmem:[#allocation2 + $0x7c8] sm:$0xff]
    %v306 = vld [vmem:[#allocation2 + $0x7d0] sm:$0xff]
    %v307 = vld [vmem:[#allocation2 + $0x7d8] sm:$0xff]
    %v308 = vld [vmem:[#allocation2 + $0x7e0] sm:$0xff]
    %v309 = vld [vmem:[#allocation2 + $0x7e8] sm:$0xff]
    %v310 = vld [vmem:[#allocation2 + $0x7f0] sm:$0xff]
    %v311 = vld [vmem:[#allocation2 + $0x7f8] sm:$0xff]
    %v312 = vld [vmem:[%s3] sm:$0x3]
    %v314 = vlaneseq
    %v315 = vshrl.u32 %v314, 7
    %v316 = vsub.s32 0, %v315
    %v317 = vrot.slane %v312, %v316
    %v318 = vlaneseq
    %v319 = vshrl.u32 %v318, 7
    %v320 = vsub.s32 1, %v319
    %v321 = vrot.slane %v312, %v320
    %v332 = vunpack.c.l.b16 %v48
    %v333 = vunpack.c.h.b16 %v48
    %v334 = vunpack.c.l.b16 %v49
    %v335 = vunpack.c.h.b16 %v49
    %v336 = vunpack.c.l.b16 %v50
    %v337 = vunpack.c.h.b16 %v50
    %v338 = vunpack.c.l.b16 %v51
    %v339 = vunpack.c.h.b16 %v51
    %v340 = vunpack.c.l.b16 %v52
    %v341 = vunpack.c.h.b16 %v52
    %v342 = vunpack.c.l.b16 %v53
    %v343 = vunpack.c.h.b16 %v53
    %v344 = vunpack.c.l.b16 %v54
    %v345 = vunpack.c.h.b16 %v54
    %v346 = vunpack.c.l.b16 %v55
    %v347 = vunpack.c.h.b16 %v55
    %v348 = vpack.c.b16 %v332, %v332
    %v349 = vpack.c.b16 %v333, %v333
    %v350 = vpack.c.b16 %v334, %v334
    %v351 = vpack.c.b16 %v335, %v335
    %v352 = vpack.c.b16 %v336, %v336
    %v353 = vpack.c.b16 %v337, %v337
    %v354 = vpack.c.b16 %v338, %v338
    %v355 = vpack.c.b16 %v339, %v339
    %v356 = vpack.c.b16 %v340, %v340
    %v357 = vpack.c.b16 %v341, %v341
    %v358 = vpack.c.b16 %v342, %v342
    %v359 = vpack.c.b16 %v343, %v343
    %v360 = vpack.c.b16 %v344, %v344
    %v361 = vpack.c.b16 %v345, %v345
    %v362 = vpack.c.b16 %v346, %v346
    %v363 = vpack.c.b16 %v347, %v347
    %v636 = vunpack.c.l.b16 %v56
    %v637 = vunpack.c.h.b16 %v56
    %v638 = vunpack.c.l.b16 %v57
    %v639 = vunpack.c.h.b16 %v57
    %v640 = vunpack.c.l.b16 %v58
    %v641 = vunpack.c.h.b16 %v58
    %v642 = vunpack.c.l.b16 %v59
    %v643 = vunpack.c.h.b16 %v59
    %v644 = vunpack.c.l.b16 %v60
    %v645 = vunpack.c.h.b16 %v60
    %v646 = vunpack.c.l.b16 %v61
    %v647 = vunpack.c.h.b16 %v61
    %v648 = vunpack.c.l.b16 %v62
    %v649 = vunpack.c.h.b16 %v62
    %v650 = vunpack.c.l.b16 %v63
    %v651 = vunpack.c.h.b16 %v63
    %v652 = vunpack.c.l.b16 %v64
    %v653 = vunpack.c.h.b16 %v64
    %v654 = vunpack.c.l.b16 %v65
    %v655 = vunpack.c.h.b16 %v65
    %v656 = vunpack.c.l.b16 %v66
    %v657 = vunpack.c.h.b16 %v66
    %v658 = vunpack.c.l.b16 %v67
    %v659 = vunpack.c.h.b16 %v67
    %v660 = vunpack.c.l.b16 %v68
    %v661 = vunpack.c.h.b16 %v68
    %v662 = vunpack.c.l.b16 %v69
    %v663 = vunpack.c.h.b16 %v69
    %v664 = vunpack.c.l.b16 %v70
    %v665 = vunpack.c.h.b16 %v70
    %v666 = vunpack.c.l.b16 %v71
    %v667 = vunpack.c.h.b16 %v71
    %v668 = vunpack.c.l.b16 %v72
    %v669 = vunpack.c.h.b16 %v72
    %v670 = vunpack.c.l.b16 %v73
    %v671 = vunpack.c.h.b16 %v73
    %v672 = vunpack.c.l.b16 %v74
    %v673 = vunpack.c.h.b16 %v74
    %v674 = vunpack.c.l.b16 %v75
    %v675 = vunpack.c.h.b16 %v75
    %v676 = vunpack.c.l.b16 %v76
    %v677 = vunpack.c.h.b16 %v76
    %v678 = vunpack.c.l.b16 %v77
    %v679 = vunpack.c.h.b16 %v77
    %v680 = vunpack.c.l.b16 %v78
    %v681 = vunpack.c.h.b16 %v78
    %v682 = vunpack.c.l.b16 %v79
    %v683 = vunpack.c.h.b16 %v79
    %v684 = vunpack.c.l.b16 %v80
    %v685 = vunpack.c.h.b16 %v80
    %v686 = vunpack.c.l.b16 %v81
    %v687 = vunpack.c.h.b16 %v81
    %v688 = vunpack.c.l.b16 %v82
    %v689 = vunpack.c.h.b16 %v82
    %v690 = vunpack.c.l.b16 %v83
    %v691 = vunpack.c.h.b16 %v83
    %v692 = vunpack.c.l.b16 %v84
    %v693 = vunpack.c.h.b16 %v84
    %v694 = vunpack.c.l.b16 %v85
    %v695 = vunpack.c.h.b16 %v85
    %v696 = vunpack.c.l.b16 %v86
    %v697 = vunpack.c.h.b16 %v86
    %v698 = vunpack.c.l.b16 %v87
    %v699 = vunpack.c.h.b16 %v87
    %v700 = vunpack.c.l.b16 %v88
    %v701 = vunpack.c.h.b16 %v88
    %v702 = vunpack.c.l.b16 %v89
    %v703 = vunpack.c.h.b16 %v89
    %v704 = vunpack.c.l.b16 %v90
    %v705 = vunpack.c.h.b16 %v90
    %v706 = vunpack.c.l.b16 %v91
    %v707 = vunpack.c.h.b16 %v91
    %v708 = vunpack.c.l.b16 %v92
    %v709 = vunpack.c.h.b16 %v92
    %v710 = vunpack.c.l.b16 %v93
    %v711 = vunpack.c.h.b16 %v93
    %v712 = vunpack.c.l.b16 %v94
    %v713 = vunpack.c.h.b16 %v94
    %v714 = vunpack.c.l.b16 %v95
    %v715 = vunpack.c.h.b16 %v95
    %v716 = vunpack.c.l.b16 %v96
    %v717 = vunpack.c.h.b16 %v96
    %v718 = vunpack.c.l.b16 %v97
    %v719 = vunpack.c.h.b16 %v97
    %v720 = vunpack.c.l.b16 %v98
    %v721 = vunpack.c.h.b16 %v98
    %v722 = vunpack.c.l.b16 %v99
    %v723 = vunpack.c.h.b16 %v99
    %v724 = vunpack.c.l.b16 %v100
    %v725 = vunpack.c.h.b16 %v100
    %v726 = vunpack.c.l.b16 %v101
    %v727 = vunpack.c.h.b16 %v101
    %v728 = vunpack.c.l.b16 %v102
    %v729 = vunpack.c.h.b16 %v102
    %v730 = vunpack.c.l.b16 %v103
    %v731 = vunpack.c.h.b16 %v103
    %v732 = vunpack.c.l.b16 %v104
    %v733 = vunpack.c.h.b16 %v104
    %v734 = vunpack.c.l.b16 %v105
    %v735 = vunpack.c.h.b16 %v105
    %v736 = vunpack.c.l.b16 %v106
    %v737 = vunpack.c.h.b16 %v106
    %v738 = vunpack.c.l.b16 %v107
    %v739 = vunpack.c.h.b16 %v107
    %v740 = vunpack.c.l.b16 %v108
    %v741 = vunpack.c.h.b16 %v108
    %v742 = vunpack.c.l.b16 %v109
    %v743 = vunpack.c.h.b16 %v109
    %v744 = vunpack.c.l.b16 %v110
    %v745 = vunpack.c.h.b16 %v110
    %v746 = vunpack.c.l.b16 %v111
    %v747 = vunpack.c.h.b16 %v111
    %v748 = vunpack.c.l.b16 %v112
    %v749 = vunpack.c.h.b16 %v112
    %v750 = vunpack.c.l.b16 %v113
    %v751 = vunpack.c.h.b16 %v113
    %v752 = vunpack.c.l.b16 %v114
    %v753 = vunpack.c.h.b16 %v114
    %v754 = vunpack.c.l.b16 %v115
    %v755 = vunpack.c.h.b16 %v115
    %v756 = vunpack.c.l.b16 %v116
    %v757 = vunpack.c.h.b16 %v116
    %v758 = vunpack.c.l.b16 %v117
    %v759 = vunpack.c.h.b16 %v117
    %v760 = vunpack.c.l.b16 %v118
    %v761 = vunpack.c.h.b16 %v118
    %v762 = vunpack.c.l.b16 %v119
    %v763 = vunpack.c.h.b16 %v119
    %v764 = vunpack.c.l.b16 %v120
    %v765 = vunpack.c.h.b16 %v120
    %v766 = vunpack.c.l.b16 %v121
    %v767 = vunpack.c.h.b16 %v121
    %v768 = vunpack.c.l.b16 %v122
    %v769 = vunpack.c.h.b16 %v122
    %v770 = vunpack.c.l.b16 %v123
    %v771 = vunpack.c.h.b16 %v123
    %v772 = vunpack.c.l.b16 %v124
    %v773 = vunpack.c.h.b16 %v124
    %v774 = vunpack.c.l.b16 %v125
    %v775 = vunpack.c.h.b16 %v125
    %v776 = vunpack.c.l.b16 %v126
    %v777 = vunpack.c.h.b16 %v126
    %v778 = vunpack.c.l.b16 %v127
    %v779 = vunpack.c.h.b16 %v127
    %v780 = vunpack.c.l.b16 %v128
    %v781 = vunpack.c.h.b16 %v128
    %v782 = vunpack.c.l.b16 %v129
    %v783 = vunpack.c.h.b16 %v129
    %v784 = vunpack.c.l.b16 %v130
    %v785 = vunpack.c.h.b16 %v130
    %v786 = vunpack.c.l.b16 %v131
    %v787 = vunpack.c.h.b16 %v131
    %v788 = vunpack.c.l.b16 %v132
    %v789 = vunpack.c.h.b16 %v132
    %v790 = vunpack.c.l.b16 %v133
    %v791 = vunpack.c.h.b16 %v133
    %v792 = vunpack.c.l.b16 %v134
    %v793 = vunpack.c.h.b16 %v134
    %v794 = vunpack.c.l.b16 %v135
    %v795 = vunpack.c.h.b16 %v135
    %v796 = vunpack.c.l.b16 %v136
    %v797 = vunpack.c.h.b16 %v136
    %v798 = vunpack.c.l.b16 %v137
    %v799 = vunpack.c.h.b16 %v137
    %v800 = vunpack.c.l.b16 %v138
    %v801 = vunpack.c.h.b16 %v138
    %v802 = vunpack.c.l.b16 %v139
    %v803 = vunpack.c.h.b16 %v139
    %v804 = vunpack.c.l.b16 %v140
    %v805 = vunpack.c.h.b16 %v140
    %v806 = vunpack.c.l.b16 %v141
    %v807 = vunpack.c.h.b16 %v141
    %v808 = vunpack.c.l.b16 %v142
    %v809 = vunpack.c.h.b16 %v142
    %v810 = vunpack.c.l.b16 %v143
    %v811 = vunpack.c.h.b16 %v143
    %v812 = vunpack.c.l.b16 %v144
    %v813 = vunpack.c.h.b16 %v144
    %v814 = vunpack.c.l.b16 %v145
    %v815 = vunpack.c.h.b16 %v145
    %v816 = vunpack.c.l.b16 %v146
    %v817 = vunpack.c.h.b16 %v146
    %v818 = vunpack.c.l.b16 %v147
    %v819 = vunpack.c.h.b16 %v147
    %v820 = vunpack.c.l.b16 %v148
    %v821 = vunpack.c.h.b16 %v148
    %v822 = vunpack.c.l.b16 %v149
    %v823 = vunpack.c.h.b16 %v149
    %v824 = vunpack.c.l.b16 %v150
    %v825 = vunpack.c.h.b16 %v150
    %v826 = vunpack.c.l.b16 %v151
    %v827 = vunpack.c.h.b16 %v151
    %v828 = vunpack.c.l.b16 %v152
    %v829 = vunpack.c.h.b16 %v152
    %v830 = vunpack.c.l.b16 %v153
    %v831 = vunpack.c.h.b16 %v153
    %v832 = vunpack.c.l.b16 %v154
    %v833 = vunpack.c.h.b16 %v154
    %v834 = vunpack.c.l.b16 %v155
    %v835 = vunpack.c.h.b16 %v155
    %v836 = vunpack.c.l.b16 %v156
    %v837 = vunpack.c.h.b16 %v156
    %v838 = vunpack.c.l.b16 %v157
    %v839 = vunpack.c.h.b16 %v157
    %v840 = vunpack.c.l.b16 %v158
    %v841 = vunpack.c.h.b16 %v158
    %v842 = vunpack.c.l.b16 %v159
    %v843 = vunpack.c.h.b16 %v159
    %v844 = vunpack.c.l.b16 %v160
    %v845 = vunpack.c.h.b16 %v160
    %v846 = vunpack.c.l.b16 %v161
    %v847 = vunpack.c.h.b16 %v161
    %v848 = vunpack.c.l.b16 %v162
    %v849 = vunpack.c.h.b16 %v162
    %v850 = vunpack.c.l.b16 %v163
    %v851 = vunpack.c.h.b16 %v163
    %v852 = vunpack.c.l.b16 %v164
    %v853 = vunpack.c.h.b16 %v164
    %v854 = vunpack.c.l.b16 %v165
    %v855 = vunpack.c.h.b16 %v165
    %v856 = vunpack.c.l.b16 %v166
    %v857 = vunpack.c.h.b16 %v166
    %v858 = vunpack.c.l.b16 %v167
    %v859 = vunpack.c.h.b16 %v167
    %v860 = vunpack.c.l.b16 %v168
    %v861 = vunpack.c.h.b16 %v168
    %v862 = vunpack.c.l.b16 %v169
    %v863 = vunpack.c.h.b16 %v169
    %v864 = vunpack.c.l.b16 %v170
    %v865 = vunpack.c.h.b16 %v170
    %v866 = vunpack.c.l.b16 %v171
    %v867 = vunpack.c.h.b16 %v171
    %v868 = vunpack.c.l.b16 %v172
    %v869 = vunpack.c.h.b16 %v172
    %v870 = vunpack.c.l.b16 %v173
    %v871 = vunpack.c.h.b16 %v173
    %v872 = vunpack.c.l.b16 %v174
    %v873 = vunpack.c.h.b16 %v174
    %v874 = vunpack.c.l.b16 %v175
    %v875 = vunpack.c.h.b16 %v175
    %v876 = vunpack.c.l.b16 %v176
    %v877 = vunpack.c.h.b16 %v176
    %v878 = vunpack.c.l.b16 %v177
    %v879 = vunpack.c.h.b16 %v177
    %v880 = vunpack.c.l.b16 %v178
    %v881 = vunpack.c.h.b16 %v178
    %v882 = vunpack.c.l.b16 %v179
    %v883 = vunpack.c.h.b16 %v179
    %v884 = vunpack.c.l.b16 %v180
    %v885 = vunpack.c.h.b16 %v180
    %v886 = vunpack.c.l.b16 %v181
    %v887 = vunpack.c.h.b16 %v181
    %v888 = vunpack.c.l.b16 %v182
    %v889 = vunpack.c.h.b16 %v182
    %v890 = vunpack.c.l.b16 %v183
    %v891 = vunpack.c.h.b16 %v183
    %v892 = vunpack.c.l.b16 %v184
    %v893 = vunpack.c.h.b16 %v184
    %v894 = vunpack.c.l.b16 %v185
    %v895 = vunpack.c.h.b16 %v185
    %v896 = vunpack.c.l.b16 %v186
    %v897 = vunpack.c.h.b16 %v186
    %v898 = vunpack.c.l.b16 %v187
    %v899 = vunpack.c.h.b16 %v187
    %v900 = vunpack.c.l.b16 %v188
    %v901 = vunpack.c.h.b16 %v188
    %v902 = vunpack.c.l.b16 %v189
    %v903 = vunpack.c.h.b16 %v189
    %v904 = vunpack.c.l.b16 %v190
    %v905 = vunpack.c.h.b16 %v190
    %v906 = vunpack.c.l.b16 %v191
    %v907 = vunpack.c.h.b16 %v191
    %v908 = vunpack.c.l.b16 %v192
    %v909 = vunpack.c.h.b16 %v192
    %v910 = vunpack.c.l.b16 %v193
    %v911 = vunpack.c.h.b16 %v193
    %v912 = vunpack.c.l.b16 %v194
    %v913 = vunpack.c.h.b16 %v194
    %v914 = vunpack.c.l.b16 %v195
    %v915 = vunpack.c.h.b16 %v195
    %v916 = vunpack.c.l.b16 %v196
    %v917 = vunpack.c.h.b16 %v196
    %v918 = vunpack.c.l.b16 %v197
    %v919 = vunpack.c.h.b16 %v197
    %v920 = vunpack.c.l.b16 %v198
    %v921 = vunpack.c.h.b16 %v198
    %v922 = vunpack.c.l.b16 %v199
    %v923 = vunpack.c.h.b16 %v199
    %v924 = vunpack.c.l.b16 %v200
    %v925 = vunpack.c.h.b16 %v200
    %v926 = vunpack.c.l.b16 %v201
    %v927 = vunpack.c.h.b16 %v201
    %v928 = vunpack.c.l.b16 %v202
    %v929 = vunpack.c.h.b16 %v202
    %v930 = vunpack.c.l.b16 %v203
    %v931 = vunpack.c.h.b16 %v203
    %v932 = vunpack.c.l.b16 %v204
    %v933 = vunpack.c.h.b16 %v204
    %v934 = vunpack.c.l.b16 %v205
    %v935 = vunpack.c.h.b16 %v205
    %v936 = vunpack.c.l.b16 %v206
    %v937 = vunpack.c.h.b16 %v206
    %v938 = vunpack.c.l.b16 %v207
    %v939 = vunpack.c.h.b16 %v207
    %v940 = vunpack.c.l.b16 %v208
    %v941 = vunpack.c.h.b16 %v208
    %v942 = vunpack.c.l.b16 %v209
    %v943 = vunpack.c.h.b16 %v209
    %v944 = vunpack.c.l.b16 %v210
    %v945 = vunpack.c.h.b16 %v210
    %v946 = vunpack.c.l.b16 %v211
    %v947 = vunpack.c.h.b16 %v211
    %v948 = vunpack.c.l.b16 %v212
    %v949 = vunpack.c.h.b16 %v212
    %v950 = vunpack.c.l.b16 %v213
    %v951 = vunpack.c.h.b16 %v213
    %v952 = vunpack.c.l.b16 %v214
    %v953 = vunpack.c.h.b16 %v214
    %v954 = vunpack.c.l.b16 %v215
    %v955 = vunpack.c.h.b16 %v215
    %v956 = vunpack.c.l.b16 %v216
    %v957 = vunpack.c.h.b16 %v216
    %v958 = vunpack.c.l.b16 %v217
    %v959 = vunpack.c.h.b16 %v217
    %v960 = vunpack.c.l.b16 %v218
    %v961 = vunpack.c.h.b16 %v218
    %v962 = vunpack.c.l.b16 %v219
    %v963 = vunpack.c.h.b16 %v219
    %v964 = vunpack.c.l.b16 %v220
    %v965 = vunpack.c.h.b16 %v220
    %v966 = vunpack.c.l.b16 %v221
    %v967 = vunpack.c.h.b16 %v221
    %v968 = vunpack.c.l.b16 %v222
    %v969 = vunpack.c.h.b16 %v222
    %v970 = vunpack.c.l.b16 %v223
    %v971 = vunpack.c.h.b16 %v223
    %v972 = vunpack.c.l.b16 %v224
    %v973 = vunpack.c.h.b16 %v224
    %v974 = vunpack.c.l.b16 %v225
    %v975 = vunpack.c.h.b16 %v225
    %v976 = vunpack.c.l.b16 %v226
    %v977 = vunpack.c.h.b16 %v226
    %v978 = vunpack.c.l.b16 %v227
    %v979 = vunpack.c.h.b16 %v227
    %v980 = vunpack.c.l.b16 %v228
    %v981 = vunpack.c.h.b16 %v228
    %v982 = vunpack.c.l.b16 %v229
    %v983 = vunpack.c.h.b16 %v229
    %v984 = vunpack.c.l.b16 %v230
    %v985 = vunpack.c.h.b16 %v230
    %v986 = vunpack.c.l.b16 %v231
    %v987 = vunpack.c.h.b16 %v231
    %v988 = vunpack.c.l.b16 %v232
    %v989 = vunpack.c.h.b16 %v232
    %v990 = vunpack.c.l.b16 %v233
    %v991 = vunpack.c.h.b16 %v233
    %v992 = vunpack.c.l.b16 %v234
    %v993 = vunpack.c.h.b16 %v234
    %v994 = vunpack.c.l.b16 %v235
    %v995 = vunpack.c.h.b16 %v235
    %v996 = vunpack.c.l.b16 %v236
    %v997 = vunpack.c.h.b16 %v236
    %v998 = vunpack.c.l.b16 %v237
    %v999 = vunpack.c.h.b16 %v237
    %v1000 = vunpack.c.l.b16 %v238
    %v1001 = vunpack.c.h.b16 %v238
    %v1002 = vunpack.c.l.b16 %v239
    %v1003 = vunpack.c.h.b16 %v239
    %v1004 = vunpack.c.l.b16 %v240
    %v1005 = vunpack.c.h.b16 %v240
    %v1006 = vunpack.c.l.b16 %v241
    %v1007 = vunpack.c.h.b16 %v241
    %v1008 = vunpack.c.l.b16 %v242
    %v1009 = vunpack.c.h.b16 %v242
    %v1010 = vunpack.c.l.b16 %v243
    %v1011 = vunpack.c.h.b16 %v243
    %v1012 = vunpack.c.l.b16 %v244
    %v1013 = vunpack.c.h.b16 %v244
    %v1014 = vunpack.c.l.b16 %v245
    %v1015 = vunpack.c.h.b16 %v245
    %v1016 = vunpack.c.l.b16 %v246
    %v1017 = vunpack.c.h.b16 %v246
    %v1018 = vunpack.c.l.b16 %v247
    %v1019 = vunpack.c.h.b16 %v247
    %v1020 = vunpack.c.l.b16 %v248
    %v1021 = vunpack.c.h.b16 %v248
    %v1022 = vunpack.c.l.b16 %v249
    %v1023 = vunpack.c.h.b16 %v249
    %v1024 = vunpack.c.l.b16 %v250
    %v1025 = vunpack.c.h.b16 %v250
    %v1026 = vunpack.c.l.b16 %v251
    %v1027 = vunpack.c.h.b16 %v251
    %v1028 = vunpack.c.l.b16 %v252
    %v1029 = vunpack.c.h.b16 %v252
    %v1030 = vunpack.c.l.b16 %v253
    %v1031 = vunpack.c.h.b16 %v253
    %v1032 = vunpack.c.l.b16 %v254
    %v1033 = vunpack.c.h.b16 %v254
    %v1034 = vunpack.c.l.b16 %v255
    %v1035 = vunpack.c.h.b16 %v255
    %v1036 = vunpack.c.l.b16 %v256
    %v1037 = vunpack.c.h.b16 %v256
    %v1038 = vunpack.c.l.b16 %v257
    %v1039 = vunpack.c.h.b16 %v257
    %v1040 = vunpack.c.l.b16 %v258
    %v1041 = vunpack.c.h.b16 %v258
    %v1042 = vunpack.c.l.b16 %v259
    %v1043 = vunpack.c.h.b16 %v259
    %v1044 = vunpack.c.l.b16 %v260
    %v1045 = vunpack.c.h.b16 %v260
    %v1046 = vunpack.c.l.b16 %v261
    %v1047 = vunpack.c.h.b16 %v261
    %v1048 = vunpack.c.l.b16 %v262
    %v1049 = vunpack.c.h.b16 %v262
    %v1050 = vunpack.c.l.b16 %v263
    %v1051 = vunpack.c.h.b16 %v263
    %v1052 = vunpack.c.l.b16 %v264
    %v1053 = vunpack.c.h.b16 %v264
    %v1054 = vunpack.c.l.b16 %v265
    %v1055 = vunpack.c.h.b16 %v265
    %v1056 = vunpack.c.l.b16 %v266
    %v1057 = vunpack.c.h.b16 %v266
    %v1058 = vunpack.c.l.b16 %v267
    %v1059 = vunpack.c.h.b16 %v267
    %v1060 = vunpack.c.l.b16 %v268
    %v1061 = vunpack.c.h.b16 %v268
    %v1062 = vunpack.c.l.b16 %v269
    %v1063 = vunpack.c.h.b16 %v269
    %v1064 = vunpack.c.l.b16 %v270
    %v1065 = vunpack.c.h.b16 %v270
    %v1066 = vunpack.c.l.b16 %v271
    %v1067 = vunpack.c.h.b16 %v271
    %v1068 = vunpack.c.l.b16 %v272
    %v1069 = vunpack.c.h.b16 %v272
    %v1070 = vunpack.c.l.b16 %v273
    %v1071 = vunpack.c.h.b16 %v273
    %v1072 = vunpack.c.l.b16 %v274
    %v1073 = vunpack.c.h.b16 %v274
    %v1074 = vunpack.c.l.b16 %v275
    %v1075 = vunpack.c.h.b16 %v275
    %v1076 = vunpack.c.l.b16 %v276
    %v1077 = vunpack.c.h.b16 %v276
    %v1078 = vunpack.c.l.b16 %v277
    %v1079 = vunpack.c.h.b16 %v277
    %v1080 = vunpack.c.l.b16 %v278
    %v1081 = vunpack.c.h.b16 %v278
    %v1082 = vunpack.c.l.b16 %v279
    %v1083 = vunpack.c.h.b16 %v279
    %v1084 = vunpack.c.l.b16 %v280
    %v1085 = vunpack.c.h.b16 %v280
    %v1086 = vunpack.c.l.b16 %v281
    %v1087 = vunpack.c.h.b16 %v281
    %v1088 = vunpack.c.l.b16 %v282
    %v1089 = vunpack.c.h.b16 %v282
    %v1090 = vunpack.c.l.b16 %v283
    %v1091 = vunpack.c.h.b16 %v283
    %v1092 = vunpack.c.l.b16 %v284
    %v1093 = vunpack.c.h.b16 %v284
    %v1094 = vunpack.c.l.b16 %v285
    %v1095 = vunpack.c.h.b16 %v285
    %v1096 = vunpack.c.l.b16 %v286
    %v1097 = vunpack.c.h.b16 %v286
    %v1098 = vunpack.c.l.b16 %v287
    %v1099 = vunpack.c.h.b16 %v287
    %v1100 = vunpack.c.l.b16 %v288
    %v1101 = vunpack.c.h.b16 %v288
    %v1102 = vunpack.c.l.b16 %v289
    %v1103 = vunpack.c.h.b16 %v289
    %v1104 = vunpack.c.l.b16 %v290
    %v1105 = vunpack.c.h.b16 %v290
    %v1106 = vunpack.c.l.b16 %v291
    %v1107 = vunpack.c.h.b16 %v291
    %v1108 = vunpack.c.l.b16 %v292
    %v1109 = vunpack.c.h.b16 %v292
    %v1110 = vunpack.c.l.b16 %v293
    %v1111 = vunpack.c.h.b16 %v293
    %v1112 = vunpack.c.l.b16 %v294
    %v1113 = vunpack.c.h.b16 %v294
    %v1114 = vunpack.c.l.b16 %v295
    %v1115 = vunpack.c.h.b16 %v295
    %v1116 = vunpack.c.l.b16 %v296
    %v1117 = vunpack.c.h.b16 %v296
    %v1118 = vunpack.c.l.b16 %v297
    %v1119 = vunpack.c.h.b16 %v297
    %v1120 = vunpack.c.l.b16 %v298
    %v1121 = vunpack.c.h.b16 %v298
    %v1122 = vunpack.c.l.b16 %v299
    %v1123 = vunpack.c.h.b16 %v299
    %v1124 = vunpack.c.l.b16 %v300
    %v1125 = vunpack.c.h.b16 %v300
    %v1126 = vunpack.c.l.b16 %v301
    %v1127 = vunpack.c.h.b16 %v301
    %v1128 = vunpack.c.l.b16 %v302
    %v1129 = vunpack.c.h.b16 %v302
    %v1130 = vunpack.c.l.b16 %v303
    %v1131 = vunpack.c.h.b16 %v303
    %v1132 = vunpack.c.l.b16 %v304
    %v1133 = vunpack.c.h.b16 %v304
    %v1134 = vunpack.c.l.b16 %v305
    %v1135 = vunpack.c.h.b16 %v305
    %v1136 = vunpack.c.l.b16 %v306
    %v1137 = vunpack.c.h.b16 %v306
    %v1138 = vunpack.c.l.b16 %v307
    %v1139 = vunpack.c.h.b16 %v307
    %v1140 = vunpack.c.l.b16 %v308
    %v1141 = vunpack.c.h.b16 %v308
    %v1142 = vunpack.c.l.b16 %v309
    %v1143 = vunpack.c.h.b16 %v309
    %v1144 = vunpack.c.l.b16 %v310
    %v1145 = vunpack.c.h.b16 %v310
    %v1146 = vunpack.c.l.b16 %v311
    %v1147 = vunpack.c.h.b16 %v311
    %v1148 = vpack.c.b16 %v638, %v636
    %v1149 = vpack.c.b16 %v639, %v637
    %v1150 = vpack.c.b16 %v642, %v640
    %v1151 = vpack.c.b16 %v643, %v641
    %v1152 = vpack.c.b16 %v646, %v644
    %v1153 = vpack.c.b16 %v647, %v645
    %v1154 = vpack.c.b16 %v650, %v648
    %v1155 = vpack.c.b16 %v651, %v649
    %v1156 = vpack.c.b16 %v654, %v652
    %v1157 = vpack.c.b16 %v655, %v653
    %v1158 = vpack.c.b16 %v658, %v656
    %v1159 = vpack.c.b16 %v659, %v657
    %v1160 = vpack.c.b16 %v662, %v660
    %v1161 = vpack.c.b16 %v663, %v661
    %v1162 = vpack.c.b16 %v666, %v664
    %v1163 = vpack.c.b16 %v667, %v665
    %v1164 = vpack.c.b16 %v670, %v668
    %v1165 = vpack.c.b16 %v671, %v669
    %v1166 = vpack.c.b16 %v674, %v672
    %v1167 = vpack.c.b16 %v675, %v673
    %v1168 = vpack.c.b16 %v678, %v676
    %v1169 = vpack.c.b16 %v679, %v677
    %v1170 = vpack.c.b16 %v682, %v680
    %v1171 = vpack.c.b16 %v683, %v681
    %v1172 = vpack.c.b16 %v686, %v684
    %v1173 = vpack.c.b16 %v687, %v685
    %v1174 = vpack.c.b16 %v690, %v688
    %v1175 = vpack.c.b16 %v691, %v689
    %v1176 = vpack.c.b16 %v694, %v692
    %v1177 = vpack.c.b16 %v695, %v693
    %v1178 = vpack.c.b16 %v698, %v696
    %v1179 = vpack.c.b16 %v699, %v697
    %v1180 = vpack.c.b16 %v702, %v700
    %v1181 = vpack.c.b16 %v703, %v701
    %v1182 = vpack.c.b16 %v706, %v704
    %v1183 = vpack.c.b16 %v707, %v705
    %v1184 = vpack.c.b16 %v710, %v708
    %v1185 = vpack.c.b16 %v711, %v709
    %v1186 = vpack.c.b16 %v714, %v712
    %v1187 = vpack.c.b16 %v715, %v713
    %v1188 = vpack.c.b16 %v718, %v716
    %v1189 = vpack.c.b16 %v719, %v717
    %v1190 = vpack.c.b16 %v722, %v720
    %v1191 = vpack.c.b16 %v723, %v721
    %v1192 = vpack.c.b16 %v726, %v724
    %v1193 = vpack.c.b16 %v727, %v725
    %v1194 = vpack.c.b16 %v730, %v728
    %v1195 = vpack.c.b16 %v731, %v729
    %v1196 = vpack.c.b16 %v734, %v732
    %v1197 = vpack.c.b16 %v735, %v733
    %v1198 = vpack.c.b16 %v738, %v736
    %v1199 = vpack.c.b16 %v739, %v737
    %v1200 = vpack.c.b16 %v742, %v740
    %v1201 = vpack.c.b16 %v743, %v741
    %v1202 = vpack.c.b16 %v746, %v744
    %v1203 = vpack.c.b16 %v747, %v745
    %v1204 = vpack.c.b16 %v750, %v748
    %v1205 = vpack.c.b16 %v751, %v749
    %v1206 = vpack.c.b16 %v754, %v752
    %v1207 = vpack.c.b16 %v755, %v753
    %v1208 = vpack.c.b16 %v758, %v756
    %v1209 = vpack.c.b16 %v759, %v757
    %v1210 = vpack.c.b16 %v762, %v760
    %v1211 = vpack.c.b16 %v763, %v761
    %v1212 = vpack.c.b16 %v766, %v764
    %v1213 = vpack.c.b16 %v767, %v765
    %v1214 = vpack.c.b16 %v770, %v768
    %v1215 = vpack.c.b16 %v771, %v769
    %v1216 = vpack.c.b16 %v774, %v772
    %v1217 = vpack.c.b16 %v775, %v773
    %v1218 = vpack.c.b16 %v778, %v776
    %v1219 = vpack.c.b16 %v779, %v777
    %v1220 = vpack.c.b16 %v782, %v780
    %v1221 = vpack.c.b16 %v783, %v781
    %v1222 = vpack.c.b16 %v786, %v784
    %v1223 = vpack.c.b16 %v787, %v785
    %v1224 = vpack.c.b16 %v790, %v788
    %v1225 = vpack.c.b16 %v791, %v789
    %v1226 = vpack.c.b16 %v794, %v792
    %v1227 = vpack.c.b16 %v795, %v793
    %v1228 = vpack.c.b16 %v798, %v796
    %v1229 = vpack.c.b16 %v799, %v797
    %v1230 = vpack.c.b16 %v802, %v800
    %v1231 = vpack.c.b16 %v803, %v801
    %v1232 = vpack.c.b16 %v806, %v804
    %v1233 = vpack.c.b16 %v807, %v805
    %v1234 = vpack.c.b16 %v810, %v808
    %v1235 = vpack.c.b16 %v811, %v809
    %v1236 = vpack.c.b16 %v814, %v812
    %v1237 = vpack.c.b16 %v815, %v813
    %v1238 = vpack.c.b16 %v818, %v816
    %v1239 = vpack.c.b16 %v819, %v817
    %v1240 = vpack.c.b16 %v822, %v820
    %v1241 = vpack.c.b16 %v823, %v821
    %v1242 = vpack.c.b16 %v826, %v824
    %v1243 = vpack.c.b16 %v827, %v825
    %v1244 = vpack.c.b16 %v830, %v828
    %v1245 = vpack.c.b16 %v831, %v829
    %v1246 = vpack.c.b16 %v834, %v832
    %v1247 = vpack.c.b16 %v835, %v833
    %v1248 = vpack.c.b16 %v838, %v836
    %v1249 = vpack.c.b16 %v839, %v837
    %v1250 = vpack.c.b16 %v842, %v840
    %v1251 = vpack.c.b16 %v843, %v841
    %v1252 = vpack.c.b16 %v846, %v844
    %v1253 = vpack.c.b16 %v847, %v845
    %v1254 = vpack.c.b16 %v850, %v848
    %v1255 = vpack.c.b16 %v851, %v849
    %v1256 = vpack.c.b16 %v854, %v852
    %v1257 = vpack.c.b16 %v855, %v853
    %v1258 = vpack.c.b16 %v858, %v856
    %v1259 = vpack.c.b16 %v859, %v857
    %v1260 = vpack.c.b16 %v862, %v860
    %v1261 = vpack.c.b16 %v863, %v861
    %v1262 = vpack.c.b16 %v866, %v864
    %v1263 = vpack.c.b16 %v867, %v865
    %v1264 = vpack.c.b16 %v870, %v868
    %v1265 = vpack.c.b16 %v871, %v869
    %v1266 = vpack.c.b16 %v874, %v872
    %v1267 = vpack.c.b16 %v875, %v873
    %v1268 = vpack.c.b16 %v878, %v876
    %v1269 = vpack.c.b16 %v879, %v877
    %v1270 = vpack.c.b16 %v882, %v880
    %v1271 = vpack.c.b16 %v883, %v881
    %v1272 = vpack.c.b16 %v886, %v884
    %v1273 = vpack.c.b16 %v887, %v885
    %v1274 = vpack.c.b16 %v890, %v888
    %v1275 = vpack.c.b16 %v891, %v889
    %v1276 = vpack.c.b16 %v894, %v892
    %v1277 = vpack.c.b16 %v895, %v893
    %v1278 = vpack.c.b16 %v898, %v896
    %v1279 = vpack.c.b16 %v899, %v897
    %v1280 = vpack.c.b16 %v902, %v900
    %v1281 = vpack.c.b16 %v903, %v901
    %v1282 = vpack.c.b16 %v906, %v904
    %v1283 = vpack.c.b16 %v907, %v905
    %v1284 = vpack.c.b16 %v910, %v908
    %v1285 = vpack.c.b16 %v911, %v909
    %v1286 = vpack.c.b16 %v914, %v912
    %v1287 = vpack.c.b16 %v915, %v913
    %v1288 = vpack.c.b16 %v918, %v916
    %v1289 = vpack.c.b16 %v919, %v917
    %v1290 = vpack.c.b16 %v922, %v920
    %v1291 = vpack.c.b16 %v923, %v921
    %v1292 = vpack.c.b16 %v926, %v924
    %v1293 = vpack.c.b16 %v927, %v925
    %v1294 = vpack.c.b16 %v930, %v928
    %v1295 = vpack.c.b16 %v931, %v929
    %v1296 = vpack.c.b16 %v934, %v932
    %v1297 = vpack.c.b16 %v935, %v933
    %v1298 = vpack.c.b16 %v938, %v936
    %v1299 = vpack.c.b16 %v939, %v937
    %v1300 = vpack.c.b16 %v942, %v940
    %v1301 = vpack.c.b16 %v943, %v941
    %v1302 = vpack.c.b16 %v946, %v944
    %v1303 = vpack.c.b16 %v947, %v945
    %v1304 = vpack.c.b16 %v950, %v948
    %v1305 = vpack.c.b16 %v951, %v949
    %v1306 = vpack.c.b16 %v954, %v952
    %v1307 = vpack.c.b16 %v955, %v953
    %v1308 = vpack.c.b16 %v958, %v956
    %v1309 = vpack.c.b16 %v959, %v957
    %v1310 = vpack.c.b16 %v962, %v960
    %v1311 = vpack.c.b16 %v963, %v961
    %v1312 = vpack.c.b16 %v966, %v964
    %v1313 = vpack.c.b16 %v967, %v965
    %v1314 = vpack.c.b16 %v970, %v968
    %v1315 = vpack.c.b16 %v971, %v969
    %v1316 = vpack.c.b16 %v974, %v972
    %v1317 = vpack.c.b16 %v975, %v973
    %v1318 = vpack.c.b16 %v978, %v976
    %v1319 = vpack.c.b16 %v979, %v977
    %v1320 = vpack.c.b16 %v982, %v980
    %v1321 = vpack.c.b16 %v983, %v981
    %v1322 = vpack.c.b16 %v986, %v984
    %v1323 = vpack.c.b16 %v987, %v985
    %v1324 = vpack.c.b16 %v990, %v988
    %v1325 = vpack.c.b16 %v991, %v989
    %v1326 = vpack.c.b16 %v994, %v992
    %v1327 = vpack.c.b16 %v995, %v993
    %v1328 = vpack.c.b16 %v998, %v996
    %v1329 = vpack.c.b16 %v999, %v997
    %v1330 = vpack.c.b16 %v1002, %v1000
    %v1331 = vpack.c.b16 %v1003, %v1001
    %v1332 = vpack.c.b16 %v1006, %v1004
    %v1333 = vpack.c.b16 %v1007, %v1005
    %v1334 = vpack.c.b16 %v1010, %v1008
    %v1335 = vpack.c.b16 %v1011, %v1009
    %v1336 = vpack.c.b16 %v1014, %v1012
    %v1337 = vpack.c.b16 %v1015, %v1013
    %v1338 = vpack.c.b16 %v1018, %v1016
    %v1339 = vpack.c.b16 %v1019, %v1017
    %v1340 = vpack.c.b16 %v1022, %v1020
    %v1341 = vpack.c.b16 %v1023, %v1021
    %v1342 = vpack.c.b16 %v1026, %v1024
    %v1343 = vpack.c.b16 %v1027, %v1025
    %v1344 = vpack.c.b16 %v1030, %v1028
    %v1345 = vpack.c.b16 %v1031, %v1029
    %v1346 = vpack.c.b16 %v1034, %v1032
    %v1347 = vpack.c.b16 %v1035, %v1033
    %v1348 = vpack.c.b16 %v1038, %v1036
    %v1349 = vpack.c.b16 %v1039, %v1037
    %v1350 = vpack.c.b16 %v1042, %v1040
    %v1351 = vpack.c.b16 %v1043, %v1041
    %v1352 = vpack.c.b16 %v1046, %v1044
    %v1353 = vpack.c.b16 %v1047, %v1045
    %v1354 = vpack.c.b16 %v1050, %v1048
    %v1355 = vpack.c.b16 %v1051, %v1049
    %v1356 = vpack.c.b16 %v1054, %v1052
    %v1357 = vpack.c.b16 %v1055, %v1053
    %v1358 = vpack.c.b16 %v1058, %v1056
    %v1359 = vpack.c.b16 %v1059, %v1057
    %v1360 = vpack.c.b16 %v1062, %v1060
    %v1361 = vpack.c.b16 %v1063, %v1061
    %v1362 = vpack.c.b16 %v1066, %v1064
    %v1363 = vpack.c.b16 %v1067, %v1065
    %v1364 = vpack.c.b16 %v1070, %v1068
    %v1365 = vpack.c.b16 %v1071, %v1069
    %v1366 = vpack.c.b16 %v1074, %v1072
    %v1367 = vpack.c.b16 %v1075, %v1073
    %v1368 = vpack.c.b16 %v1078, %v1076
    %v1369 = vpack.c.b16 %v1079, %v1077
    %v1370 = vpack.c.b16 %v1082, %v1080
    %v1371 = vpack.c.b16 %v1083, %v1081
    %v1372 = vpack.c.b16 %v1086, %v1084
    %v1373 = vpack.c.b16 %v1087, %v1085
    %v1374 = vpack.c.b16 %v1090, %v1088
    %v1375 = vpack.c.b16 %v1091, %v1089
    %v1376 = vpack.c.b16 %v1094, %v1092
    %v1377 = vpack.c.b16 %v1095, %v1093
    %v1378 = vpack.c.b16 %v1098, %v1096
    %v1379 = vpack.c.b16 %v1099, %v1097
    %v1380 = vpack.c.b16 %v1102, %v1100
    %v1381 = vpack.c.b16 %v1103, %v1101
    %v1382 = vpack.c.b16 %v1106, %v1104
    %v1383 = vpack.c.b16 %v1107, %v1105
    %v1384 = vpack.c.b16 %v1110, %v1108
    %v1385 = vpack.c.b16 %v1111, %v1109
    %v1386 = vpack.c.b16 %v1114, %v1112
    %v1387 = vpack.c.b16 %v1115, %v1113
    %v1388 = vpack.c.b16 %v1118, %v1116
    %v1389 = vpack.c.b16 %v1119, %v1117
    %v1390 = vpack.c.b16 %v1122, %v1120
    %v1391 = vpack.c.b16 %v1123, %v1121
    %v1392 = vpack.c.b16 %v1126, %v1124
    %v1393 = vpack.c.b16 %v1127, %v1125
    %v1394 = vpack.c.b16 %v1130, %v1128
    %v1395 = vpack.c.b16 %v1131, %v1129
    %v1396 = vpack.c.b16 %v1134, %v1132
    %v1397 = vpack.c.b16 %v1135, %v1133
    %v1398 = vpack.c.b16 %v1138, %v1136
    %v1399 = vpack.c.b16 %v1139, %v1137
    %v1400 = vpack.c.b16 %v1142, %v1140
    %v1401 = vpack.c.b16 %v1143, %v1141
    %v1402 = vpack.c.b16 %v1146, %v1144
    %v1403 = vpack.c.b16 %v1147, %v1145
    %1660 = vmatprep.subr.bf16.mxu0 %v1163
    %1661 = vmatpush1.bf16.msra.mxu0 %v1162
    %1662 = vmatprep.subr.bf16.mxu0 %v1161
    %1663 = vmatpush1.bf16.msra.mxu0 %v1160
    %1664 = vmatprep.subr.bf16.mxu0 %v1159
    %1665 = vmatpush1.bf16.msra.mxu0 %v1158
    %1666 = vmatprep.subr.bf16.mxu0 %v1157
    %1667 = vmatpush1.bf16.msra.mxu0 %v1156
    %1668 = vmatprep.subr.bf16.mxu0 %v1155
    %1669 = vmatpush1.bf16.msra.mxu0 %v1154
    %1670 = vmatprep.subr.bf16.mxu0 %v1153
    %1671 = vmatpush1.bf16.msra.mxu0 %v1152
    %1672 = vmatprep.subr.bf16.mxu0 %v1151
    %1673 = vmatpush1.bf16.msra.mxu0 %v1150
    %1674 = vmatprep.subr.bf16.mxu0 %v1149
    %1675 = vmatpush1.bf16.msra.mxu0 %v1148
    %1676 = vmatprep.subr.bf16.mxu0 %v1179
    %1677 = vmatpush2.bf16.msra.mxu0 %v1178
    %1678 = vmatprep.subr.bf16.mxu0 %v1177
    %1679 = vmatpush2.bf16.msra.mxu0 %v1176
    %1680 = vmatprep.subr.bf16.mxu0 %v1175
    %1681 = vmatpush2.bf16.msra.mxu0 %v1174
    %1682 = vmatprep.subr.bf16.mxu0 %v1173
    %1683 = vmatpush2.bf16.msra.mxu0 %v1172
    %1684 = vmatprep.subr.bf16.mxu0 %v1171
    %1685 = vmatpush2.bf16.msra.mxu0 %v1170
    %1686 = vmatprep.subr.bf16.mxu0 %v1169
    %1687 = vmatpush2.bf16.msra.mxu0 %v1168
    %1688 = vmatprep.subr.bf16.mxu0 %v1167
    %1689 = vmatpush2.bf16.msra.mxu0 %v1166
    %1690 = vmatprep.subr.bf16.mxu0 %v1165
    %1691 = vmatpush2.bf16.msra.mxu0 %v1164
    %1692 = vmatprep.mubr.bf16.mxu0 %v349
    %1693 = vmatmul.mubr.bf16.gmra.mxu0 %v348
    %v1694 = vpop.f32.mrf.mxu0
    %v1695 = vadd.f32 %v317, %v1694
    %v1696 = vpop.f32.mrf.mxu0
    %v1697 = vadd.f32 %v321, %v1696
    %v1698 = vpop.f32.mrf.mxu0
    %v1699 = vpop.f32.mrf.mxu0
    %1700 = vdwg.mxu0
    %1701 = vmatprep.subr.bf16.mxu0 %v1195
    %1702 = vmatpush1.bf16.msra.mxu0 %v1194
    %1703 = vmatprep.subr.bf16.mxu0 %v1193
    %1704 = vmatpush1.bf16.msra.mxu0 %v1192
    %1705 = vmatprep.subr.bf16.mxu0 %v1191
    %1706 = vmatpush1.bf16.msra.mxu0 %v1190
    %1707 = vmatprep.subr.bf16.mxu0 %v1189
    %1708 = vmatpush1.bf16.msra.mxu0 %v1188
    %1709 = vmatprep.subr.bf16.mxu0 %v1187
    %1710 = vmatpush1.bf16.msra.mxu0 %v1186
    %1711 = vmatprep.subr.bf16.mxu0 %v1185
    %1712 = vmatpush1.bf16.msra.mxu0 %v1184
    %1713 = vmatprep.subr.bf16.mxu0 %v1183
    %1714 = vmatpush1.bf16.msra.mxu0 %v1182
    %1715 = vmatprep.subr.bf16.mxu0 %v1181
    %1716 = vmatpush1.bf16.msra.mxu0 %v1180
    %1717 = vmatprep.subr.bf16.mxu0 %v1211
    %1718 = vmatpush2.bf16.msra.mxu0 %v1210
    %1719 = vmatprep.subr.bf16.mxu0 %v1209
    %1720 = vmatpush2.bf16.msra.mxu0 %v1208
    %1721 = vmatprep.subr.bf16.mxu0 %v1207
    %1722 = vmatpush2.bf16.msra.mxu0 %v1206
    %1723 = vmatprep.subr.bf16.mxu0 %v1205
    %1724 = vmatpush2.bf16.msra.mxu0 %v1204
    %1725 = vmatprep.subr.bf16.mxu0 %v1203
    %1726 = vmatpush2.bf16.msra.mxu0 %v1202
    %1727 = vmatprep.subr.bf16.mxu0 %v1201
    %1728 = vmatpush2.bf16.msra.mxu0 %v1200
    %1729 = vmatprep.subr.bf16.mxu0 %v1199
    %1730 = vmatpush2.bf16.msra.mxu0 %v1198
    %1731 = vmatprep.subr.bf16.mxu0 %v1197
    %1732 = vmatpush2.bf16.msra.mxu0 %v1196
    %1733 = vmatprep.mubr.bf16.mxu0 %v351
    %1734 = vmatmul.mubr.bf16.gmra.mxu0 %v350
    %v1735 = vpop.f32.mrf.mxu0
    %v1736 = vadd.f32 %v1695, %v1735
    %v1737 = vpop.f32.mrf.mxu0
    %v1738 = vadd.f32 %v1697, %v1737
    %v1739 = vpop.f32.mrf.mxu0
    %v1740 = vpop.f32.mrf.mxu0
    %1741 = vdwg.mxu0
    %1742 = vmatprep.subr.bf16.mxu0 %v1227
    %1743 = vmatpush1.bf16.msra.mxu0 %v1226
    %1744 = vmatprep.subr.bf16.mxu0 %v1225
    %1745 = vmatpush1.bf16.msra.mxu0 %v1224
    %1746 = vmatprep.subr.bf16.mxu0 %v1223
    %1747 = vmatpush1.bf16.msra.mxu0 %v1222
    %1748 = vmatprep.subr.bf16.mxu0 %v1221
    %1749 = vmatpush1.bf16.msra.mxu0 %v1220
    %1750 = vmatprep.subr.bf16.mxu0 %v1219
    %1751 = vmatpush1.bf16.msra.mxu0 %v1218
    %1752 = vmatprep.subr.bf16.mxu0 %v1217
    %1753 = vmatpush1.bf16.msra.mxu0 %v1216
    %1754 = vmatprep.subr.bf16.mxu0 %v1215
    %1755 = vmatpush1.bf16.msra.mxu0 %v1214
    %1756 = vmatprep.subr.bf16.mxu0 %v1213
    %1757 = vmatpush1.bf16.msra.mxu0 %v1212
    %1758 = vmatprep.subr.bf16.mxu0 %v1243
    %1759 = vmatpush2.bf16.msra.mxu0 %v1242
    %1760 = vmatprep.subr.bf16.mxu0 %v1241
    %1761 = vmatpush2.bf16.msra.mxu0 %v1240
    %1762 = vmatprep.subr.bf16.mxu0 %v1239
    %1763 = vmatpush2.bf16.msra.mxu0 %v1238
    %1764 = vmatprep.subr.bf16.mxu0 %v1237
    %1765 = vmatpush2.bf16.msra.mxu0 %v1236
    %1766 = vmatprep.subr.bf16.mxu0 %v1235
    %1767 = vmatpush2.bf16.msra.mxu0 %v1234
    %1768 = vmatprep.subr.bf16.mxu0 %v1233
    %1769 = vmatpush2.bf16.msra.mxu0 %v1232
    %1770 = vmatprep.subr.bf16.mxu0 %v1231
    %1771 = vmatpush2.bf16.msra.mxu0 %v1230
    %1772 = vmatprep.subr.bf16.mxu0 %v1229
    %1773 = vmatpush2.bf16.msra.mxu0 %v1228
    %1774 = vmatprep.mubr.bf16.mxu0 %v353
    %1775 = vmatmul.mubr.bf16.gmra.mxu0 %v352
    %v1776 = vpop.f32.mrf.mxu0
    %v1777 = vadd.f32 %v1736, %v1776
    %v1778 = vpop.f32.mrf.mxu0
    %v1779 = vadd.f32 %v1738, %v1778
    %v1780 = vpop.f32.mrf.mxu0
    %v1781 = vpop.f32.mrf.mxu0
    %1782 = vdwg.mxu0
    %1783 = vmatprep.subr.bf16.mxu0 %v1259
    %1784 = vmatpush1.bf16.msra.mxu0 %v1258
    %1785 = vmatprep.subr.bf16.mxu0 %v1257
    %1786 = vmatpush1.bf16.msra.mxu0 %v1256
    %1787 = vmatprep.subr.bf16.mxu0 %v1255
    %1788 = vmatpush1.bf16.msra.mxu0 %v1254
    %1789 = vmatprep.subr.bf16.mxu0 %v1253
    %1790 = vmatpush1.bf16.msra.mxu0 %v1252
    %1791 = vmatprep.subr.bf16.mxu0 %v1251
    %1792 = vmatpush1.bf16.msra.mxu0 %v1250
    %1793 = vmatprep.subr.bf16.mxu0 %v1249
    %1794 = vmatpush1.bf16.msra.mxu0 %v1248
    %1795 = vmatprep.subr.bf16.mxu0 %v1247
    %1796 = vmatpush1.bf16.msra.mxu0 %v1246
    %1797 = vmatprep.subr.bf16.mxu0 %v1245
    %1798 = vmatpush1.bf16.msra.mxu0 %v1244
    %1799 = vmatprep.subr.bf16.mxu0 %v1275
    %1800 = vmatpush2.bf16.msra.mxu0 %v1274
    %1801 = vmatprep.subr.bf16.mxu0 %v1273
    %1802 = vmatpush2.bf16.msra.mxu0 %v1272
    %1803 = vmatprep.subr.bf16.mxu0 %v1271
    %1804 = vmatpush2.bf16.msra.mxu0 %v1270
    %1805 = vmatprep.subr.bf16.mxu0 %v1269
    %1806 = vmatpush2.bf16.msra.mxu0 %v1268
    %1807 = vmatprep.subr.bf16.mxu0 %v1267
    %1808 = vmatpush2.bf16.msra.mxu0 %v1266
    %1809 = vmatprep.subr.bf16.mxu0 %v1265
    %1810 = vmatpush2.bf16.msra.mxu0 %v1264
    %1811 = vmatprep.subr.bf16.mxu0 %v1263
    %1812 = vmatpush2.bf16.msra.mxu0 %v1262
    %1813 = vmatprep.subr.bf16.mxu0 %v1261
    %1814 = vmatpush2.bf16.msra.mxu0 %v1260
    %1815 = vmatprep.mubr.bf16.mxu0 %v355
    %1816 = vmatmul.mubr.bf16.gmra.mxu0 %v354
    %v1817 = vpop.f32.mrf.mxu0
    %v1818 = vadd.f32 %v1777, %v1817
    %v1819 = vpop.f32.mrf.mxu0
    %v1820 = vadd.f32 %v1779, %v1819
    %v1821 = vpop.f32.mrf.mxu0
    %v1822 = vpop.f32.mrf.mxu0
    %1823 = vdwg.mxu0
    %1824 = vmatprep.subr.bf16.mxu0 %v1291
    %1825 = vmatpush1.bf16.msra.mxu0 %v1290
    %1826 = vmatprep.subr.bf16.mxu0 %v1289
    %1827 = vmatpush1.bf16.msra.mxu0 %v1288
    %1828 = vmatprep.subr.bf16.mxu0 %v1287
    %1829 = vmatpush1.bf16.msra.mxu0 %v1286
    %1830 = vmatprep.subr.bf16.mxu0 %v1285
    %1831 = vmatpush1.bf16.msra.mxu0 %v1284
    %1832 = vmatprep.subr.bf16.mxu0 %v1283
    %1833 = vmatpush1.bf16.msra.mxu0 %v1282
    %1834 = vmatprep.subr.bf16.mxu0 %v1281
    %1835 = vmatpush1.bf16.msra.mxu0 %v1280
    %1836 = vmatprep.subr.bf16.mxu0 %v1279
    %1837 = vmatpush1.bf16.msra.mxu0 %v1278
    %1838 = vmatprep.subr.bf16.mxu0 %v1277
    %1839 = vmatpush1.bf16.msra.mxu0 %v1276
    %1840 = vmatprep.subr.bf16.mxu0 %v1307
    %1841 = vmatpush2.bf16.msra.mxu0 %v1306
    %1842 = vmatprep.subr.bf16.mxu0 %v1305
    %1843 = vmatpush2.bf16.msra.mxu0 %v1304
    %1844 = vmatprep.subr.bf16.mxu0 %v1303
    %1845 = vmatpush2.bf16.msra.mxu0 %v1302
    %1846 = vmatprep.subr.bf16.mxu0 %v1301
    %1847 = vmatpush2.bf16.msra.mxu0 %v1300
    %1848 = vmatprep.subr.bf16.mxu0 %v1299
    %1849 = vmatpush2.bf16.msra.mxu0 %v1298
    %1850 = vmatprep.subr.bf16.mxu0 %v1297
    %1851 = vmatpush2.bf16.msra.mxu0 %v1296
    %1852 = vmatprep.subr.bf16.mxu0 %v1295
    %1853 = vmatpush2.bf16.msra.mxu0 %v1294
    %1854 = vmatprep.subr.bf16.mxu0 %v1293
    %1855 = vmatpush2.bf16.msra.mxu0 %v1292
    %1856 = vmatprep.mubr.bf16.mxu0 %v357
    %1857 = vmatmul.mubr.bf16.gmra.mxu0 %v356
    %v1858 = vpop.f32.mrf.mxu0
    %v1859 = vadd.f32 %v1818, %v1858
    %v1860 = vpop.f32.mrf.mxu0
    %v1861 = vadd.f32 %v1820, %v1860
    %v1862 = vpop.f32.mrf.mxu0
    %v1863 = vpop.f32.mrf.mxu0
    %1864 = vdwg.mxu0
    %1865 = vmatprep.subr.bf16.mxu0 %v1323
    %1866 = vmatpush1.bf16.msra.mxu0 %v1322
    %1867 = vmatprep.subr.bf16.mxu0 %v1321
    %1868 = vmatpush1.bf16.msra.mxu0 %v1320
    %1869 = vmatprep.subr.bf16.mxu0 %v1319
    %1870 = vmatpush1.bf16.msra.mxu0 %v1318
    %1871 = vmatprep.subr.bf16.mxu0 %v1317
    %1872 = vmatpush1.bf16.msra.mxu0 %v1316
    %1873 = vmatprep.subr.bf16.mxu0 %v1315
    %1874 = vmatpush1.bf16.msra.mxu0 %v1314
    %1875 = vmatprep.subr.bf16.mxu0 %v1313
    %1876 = vmatpush1.bf16.msra.mxu0 %v1312
    %1877 = vmatprep.subr.bf16.mxu0 %v1311
    %1878 = vmatpush1.bf16.msra.mxu0 %v1310
    %1879 = vmatprep.subr.bf16.mxu0 %v1309
    %1880 = vmatpush1.bf16.msra.mxu0 %v1308
    %1881 = vmatprep.subr.bf16.mxu0 %v1339
    %1882 = vmatpush2.bf16.msra.mxu0 %v1338
    %1883 = vmatprep.subr.bf16.mxu0 %v1337
    %1884 = vmatpush2.bf16.msra.mxu0 %v1336
    %1885 = vmatprep.subr.bf16.mxu0 %v1335
    %1886 = vmatpush2.bf16.msra.mxu0 %v1334
    %1887 = vmatprep.subr.bf16.mxu0 %v1333
    %1888 = vmatpush2.bf16.msra.mxu0 %v1332
    %1889 = vmatprep.subr.bf16.mxu0 %v1331
    %1890 = vmatpush2.bf16.msra.mxu0 %v1330
    %1891 = vmatprep.subr.bf16.mxu0 %v1329
    %1892 = vmatpush2.bf16.msra.mxu0 %v1328
    %1893 = vmatprep.subr.bf16.mxu0 %v1327
    %1894 = vmatpush2.bf16.msra.mxu0 %v1326
    %1895 = vmatprep.subr.bf16.mxu0 %v1325
    %1896 = vmatpush2.bf16.msra.mxu0 %v1324
    %1897 = vmatprep.mubr.bf16.mxu0 %v359
    %1898 = vmatmul.mubr.bf16.gmra.mxu0 %v358
    %v1899 = vpop.f32.mrf.mxu0
    %v1900 = vadd.f32 %v1859, %v1899
    %v1901 = vpop.f32.mrf.mxu0
    %v1902 = vadd.f32 %v1861, %v1901
    %v1903 = vpop.f32.mrf.mxu0
    %v1904 = vpop.f32.mrf.mxu0
    %1905 = vdwg.mxu0
    %1906 = vmatprep.subr.bf16.mxu0 %v1355
    %1907 = vmatpush1.bf16.msra.mxu0 %v1354
    %1908 = vmatprep.subr.bf16.mxu0 %v1353
    %1909 = vmatpush1.bf16.msra.mxu0 %v1352
    %1910 = vmatprep.subr.bf16.mxu0 %v1351
    %1911 = vmatpush1.bf16.msra.mxu0 %v1350
    %1912 = vmatprep.subr.bf16.mxu0 %v1349
    %1913 = vmatpush1.bf16.msra.mxu0 %v1348
    %1914 = vmatprep.subr.bf16.mxu0 %v1347
    %1915 = vmatpush1.bf16.msra.mxu0 %v1346
    %1916 = vmatprep.subr.bf16.mxu0 %v1345
    %1917 = vmatpush1.bf16.msra.mxu0 %v1344
    %1918 = vmatprep.subr.bf16.mxu0 %v1343
    %1919 = vmatpush1.bf16.msra.mxu0 %v1342
    %1920 = vmatprep.subr.bf16.mxu0 %v1341
    %1921 = vmatpush1.bf16.msra.mxu0 %v1340
    %1922 = vmatprep.subr.bf16.mxu0 %v1371
    %1923 = vmatpush2.bf16.msra.mxu0 %v1370
    %1924 = vmatprep.subr.bf16.mxu0 %v1369
    %1925 = vmatpush2.bf16.msra.mxu0 %v1368
    %1926 = vmatprep.subr.bf16.mxu0 %v1367
    %1927 = vmatpush2.bf16.msra.mxu0 %v1366
    %1928 = vmatprep.subr.bf16.mxu0 %v1365
    %1929 = vmatpush2.bf16.msra.mxu0 %v1364
    %1930 = vmatprep.subr.bf16.mxu0 %v1363
    %1931 = vmatpush2.bf16.msra.mxu0 %v1362
    %1932 = vmatprep.subr.bf16.mxu0 %v1361
    %1933 = vmatpush2.bf16.msra.mxu0 %v1360
    %1934 = vmatprep.subr.bf16.mxu0 %v1359
    %1935 = vmatpush2.bf16.msra.mxu0 %v1358
    %1936 = vmatprep.subr.bf16.mxu0 %v1357
    %1937 = vmatpush2.bf16.msra.mxu0 %v1356
    %1938 = vmatprep.mubr.bf16.mxu0 %v361
    %1939 = vmatmul.mubr.bf16.gmra.mxu0 %v360
    %v1940 = vpop.f32.mrf.mxu0
    %v1941 = vadd.f32 %v1900, %v1940
    %v1942 = vpop.f32.mrf.mxu0
    %v1943 = vadd.f32 %v1902, %v1942
    %v1944 = vpop.f32.mrf.mxu0
    %v1945 = vpop.f32.mrf.mxu0
    %1946 = vdwg.mxu0
    %1947 = vmatprep.subr.bf16.mxu0 %v1387
    %1948 = vmatpush1.bf16.msra.mxu0 %v1386
    %1949 = vmatprep.subr.bf16.mxu0 %v1385
    %1950 = vmatpush1.bf16.msra.mxu0 %v1384
    %1951 = vmatprep.subr.bf16.mxu0 %v1383
    %1952 = vmatpush1.bf16.msra.mxu0 %v1382
    %1953 = vmatprep.subr.bf16.mxu0 %v1381
    %1954 = vmatpush1.bf16.msra.mxu0 %v1380
    %1955 = vmatprep.subr.bf16.mxu0 %v1379
    %1956 = vmatpush1.bf16.msra.mxu0 %v1378
    %1957 = vmatprep.subr.bf16.mxu0 %v1377
    %1958 = vmatpush1.bf16.msra.mxu0 %v1376
    %1959 = vmatprep.subr.bf16.mxu0 %v1375
    %1960 = vmatpush1.bf16.msra.mxu0 %v1374
    %1961 = vmatprep.subr.bf16.mxu0 %v1373
    %1962 = vmatpush1.bf16.msra.mxu0 %v1372
    %1963 = vmatprep.subr.bf16.mxu0 %v1403
    %1964 = vmatpush2.bf16.msra.mxu0 %v1402
    %1965 = vmatprep.subr.bf16.mxu0 %v1401
    %1966 = vmatpush2.bf16.msra.mxu0 %v1400
    %1967 = vmatprep.subr.bf16.mxu0 %v1399
    %1968 = vmatpush2.bf16.msra.mxu0 %v1398
    %1969 = vmatprep.subr.bf16.mxu0 %v1397
    %1970 = vmatpush2.bf16.msra.mxu0 %v1396
    %1971 = vmatprep.subr.bf16.mxu0 %v1395
    %1972 = vmatpush2.bf16.msra.mxu0 %v1394
    %1973 = vmatprep.subr.bf16.mxu0 %v1393
    %1974 = vmatpush2.bf16.msra.mxu0 %v1392
    %1975 = vmatprep.subr.bf16.mxu0 %v1391
    %1976 = vmatpush2.bf16.msra.mxu0 %v1390
    %1977 = vmatprep.subr.bf16.mxu0 %v1389
    %1978 = vmatpush2.bf16.msra.mxu0 %v1388
    %1979 = vmatprep.mubr.bf16.mxu0 %v363
    %1980 = vmatmul.mubr.bf16.gmra.mxu0 %v362
    %v1981 = vpop.f32.mrf.mxu0
    %v1982 = vadd.f32 %v1941, %v1981
    %v1983 = vpop.f32.mrf.mxu0
    %v1984 = vadd.f32 %v1943, %v1983
    %v1985 = vpop.f32.mrf.mxu0
    %v1986 = vpop.f32.mrf.mxu0
    %1987 = vdwg.mxu0
    %v1988 = vld [vmem:[%s4] sm:$0xff]
    %v1989 = vld [vmem:[%s4 + $0x8] sm:$0xff]
    %v1990 = vld [vmem:[#allocation4] sm:$0xff]
    %v1991 = vld [vmem:[#allocation4 + $0x8] sm:$0xff]
    %v1992 = vld [vmem:[#allocation4 + $0x10] sm:$0xff]
    %v1993 = vld [vmem:[#allocation4 + $0x18] sm:$0xff]
    %v1994 = vld [vmem:[#allocation4 + $0x20] sm:$0xff]
    %v1995 = vld [vmem:[#allocation4 + $0x28] sm:$0xff]
    %v1996 = vld [vmem:[#allocation4 + $0x30] sm:$0xff]
    %v1997 = vld [vmem:[#allocation4 + $0x38] sm:$0xff]
    %v1998 = vld [vmem:[#allocation4 + $0x40] sm:$0xff]
    %v1999 = vld [vmem:[#allocation4 + $0x48] sm:$0xff]
    %v2000 = vld [vmem:[#allocation4 + $0x50] sm:$0xff]
    %v2001 = vld [vmem:[#allocation4 + $0x58] sm:$0xff]
    %v2002 = vld [vmem:[#allocation4 + $0x60] sm:$0xff]
    %v2003 = vld [vmem:[#allocation4 + $0x68] sm:$0xff]
    %v2004 = vld [vmem:[#allocation4 + $0x70] sm:$0xff]
    %v2005 = vld [vmem:[#allocation4 + $0x78] sm:$0xff]
    %v2006 = vld [vmem:[#allocation4 + $0x80] sm:$0xff]
    %v2007 = vld [vmem:[#allocation4 + $0x88] sm:$0xff]
    %v2008 = vld [vmem:[#allocation4 + $0x90] sm:$0xff]
    %v2009 = vld [vmem:[#allocation4 + $0x98] sm:$0xff]
    %v2010 = vld [vmem:[#allocation4 + $0xa0] sm:$0xff]
    %v2011 = vld [vmem:[#allocation4 + $0xa8] sm:$0xff]
    %v2012 = vld [vmem:[#allocation4 + $0xb0] sm:$0xff]
    %v2013 = vld [vmem:[#allocation4 + $0xb8] sm:$0xff]
    %v2014 = vld [vmem:[#allocation4 + $0xc0] sm:$0xff]
    %v2015 = vld [vmem:[#allocation4 + $0xc8] sm:$0xff]
    %v2016 = vld [vmem:[#allocation4 + $0xd0] sm:$0xff]
    %v2017 = vld [vmem:[#allocation4 + $0xd8] sm:$0xff]
    %v2018 = vld [vmem:[#allocation4 + $0xe0] sm:$0xff]
    %v2019 = vld [vmem:[#allocation4 + $0xe8] sm:$0xff]
    %v2020 = vld [vmem:[#allocation4 + $0xf0] sm:$0xff]
    %v2021 = vld [vmem:[#allocation4 + $0xf8] sm:$0xff]
    %v2022 = vadd.f32 %v1988, %v1982
    %v2023 = vadd.f32 %v1989, %v1984
    %v2024 = vpack.c.bf16 %v1988, %v1988
    %v2025 = vpack.c.bf16 %v1989, %v1989
    %v2058 = vunpack.c.l.b16 %v1990
    %v2059 = vunpack.c.h.b16 %v1990
    %v2060 = vunpack.c.l.b16 %v1991
    %v2061 = vunpack.c.h.b16 %v1991
    %v2062 = vunpack.c.l.b16 %v1992
    %v2063 = vunpack.c.h.b16 %v1992
    %v2064 = vunpack.c.l.b16 %v1993
    %v2065 = vunpack.c.h.b16 %v1993
    %v2066 = vunpack.c.l.b16 %v1994
    %v2067 = vunpack.c.h.b16 %v1994
    %v2068 = vunpack.c.l.b16 %v1995
    %v2069 = vunpack.c.h.b16 %v1995
    %v2070 = vunpack.c.l.b16 %v1996
    %v2071 = vunpack.c.h.b16 %v1996
    %v2072 = vunpack.c.l.b16 %v1997
    %v2073 = vunpack.c.h.b16 %v1997
    %v2074 = vunpack.c.l.b16 %v1998
    %v2075 = vunpack.c.h.b16 %v1998
    %v2076 = vunpack.c.l.b16 %v1999
    %v2077 = vunpack.c.h.b16 %v1999
    %v2078 = vunpack.c.l.b16 %v2000
    %v2079 = vunpack.c.h.b16 %v2000
    %v2080 = vunpack.c.l.b16 %v2001
    %v2081 = vunpack.c.h.b16 %v2001
    %v2082 = vunpack.c.l.b16 %v2002
    %v2083 = vunpack.c.h.b16 %v2002
    %v2084 = vunpack.c.l.b16 %v2003
    %v2085 = vunpack.c.h.b16 %v2003
    %v2086 = vunpack.c.l.b16 %v2004
    %v2087 = vunpack.c.h.b16 %v2004
    %v2088 = vunpack.c.l.b16 %v2005
    %v2089 = vunpack.c.h.b16 %v2005
    %v2090 = vunpack.c.l.b16 %v2006
    %v2091 = vunpack.c.h.b16 %v2006
    %v2092 = vunpack.c.l.b16 %v2007
    %v2093 = vunpack.c.h.b16 %v2007
    %v2094 = vunpack.c.l.b16 %v2008
    %v2095 = vunpack.c.h.b16 %v2008
    %v2096 = vunpack.c.l.b16 %v2009
    %v2097 = vunpack.c.h.b16 %v2009
    %v2098 = vunpack.c.l.b16 %v2010
    %v2099 = vunpack.c.h.b16 %v2010
    %v2100 = vunpack.c.l.b16 %v2011
    %v2101 = vunpack.c.h.b16 %v2011
    %v2102 = vunpack.c.l.b16 %v2012
    %v2103 = vunpack.c.h.b16 %v2012
    %v2104 = vunpack.c.l.b16 %v2013
    %v2105 = vunpack.c.h.b16 %v2013
    %v2106 = vunpack.c.l.b16 %v2014
    %v2107 = vunpack.c.h.b16 %v2014
    %v2108 = vunpack.c.l.b16 %v2015
    %v2109 = vunpack.c.h.b16 %v2015
    %v2110 = vunpack.c.l.b16 %v2016
    %v2111 = vunpack.c.h.b16 %v2016
    %v2112 = vunpack.c.l.b16 %v2017
    %v2113 = vunpack.c.h.b16 %v2017
    %v2114 = vunpack.c.l.b16 %v2018
    %v2115 = vunpack.c.h.b16 %v2018
    %v2116 = vunpack.c.l.b16 %v2019
    %v2117 = vunpack.c.h.b16 %v2019
    %v2118 = vunpack.c.l.b16 %v2020
    %v2119 = vunpack.c.h.b16 %v2020
    %v2120 = vunpack.c.l.b16 %v2021
    %v2121 = vunpack.c.h.b16 %v2021
    %v2122 = vpack.c.b16 %v2060, %v2058
    %v2123 = vpack.c.b16 %v2061, %v2059
    %v2124 = vpack.c.b16 %v2064, %v2062
    %v2125 = vpack.c.b16 %v2065, %v2063
    %v2126 = vpack.c.b16 %v2068, %v2066
    %v2127 = vpack.c.b16 %v2069, %v2067
    %v2128 = vpack.c.b16 %v2072, %v2070
    %v2129 = vpack.c.b16 %v2073, %v2071
    %v2130 = vpack.c.b16 %v2076, %v2074
    %v2131 = vpack.c.b16 %v2077, %v2075
    %v2132 = vpack.c.b16 %v2080, %v2078
    %v2133 = vpack.c.b16 %v2081, %v2079
    %v2134 = vpack.c.b16 %v2084, %v2082
    %v2135 = vpack.c.b16 %v2085, %v2083
    %v2136 = vpack.c.b16 %v2088, %v2086
    %v2137 = vpack.c.b16 %v2089, %v2087
    %v2138 = vpack.c.b16 %v2092, %v2090
    %v2139 = vpack.c.b16 %v2093, %v2091
    %v2140 = vpack.c.b16 %v2096, %v2094
    %v2141 = vpack.c.b16 %v2097, %v2095
    %v2142 = vpack.c.b16 %v2100, %v2098
    %v2143 = vpack.c.b16 %v2101, %v2099
    %v2144 = vpack.c.b16 %v2104, %v2102
    %v2145 = vpack.c.b16 %v2105, %v2103
    %v2146 = vpack.c.b16 %v2108, %v2106
    %v2147 = vpack.c.b16 %v2109, %v2107
    %v2148 = vpack.c.b16 %v2112, %v2110
    %v2149 = vpack.c.b16 %v2113, %v2111
    %v2150 = vpack.c.b16 %v2116, %v2114
    %v2151 = vpack.c.b16 %v2117, %v2115
    %v2152 = vpack.c.b16 %v2120, %v2118
    %v2153 = vpack.c.b16 %v2121, %v2119
    %2186 = vmatprep.subr.bf16.mxu0 %v2137
    %2187 = vmatpush1.bf16.msra.mxu0 %v2136
    %2188 = vmatprep.subr.bf16.mxu0 %v2135
    %2189 = vmatpush1.bf16.msra.mxu0 %v2134
    %2190 = vmatprep.subr.bf16.mxu0 %v2133
    %2191 = vmatpush1.bf16.msra.mxu0 %v2132
    %2192 = vmatprep.subr.bf16.mxu0 %v2131
    %2193 = vmatpush1.bf16.msra.mxu0 %v2130
    %2194 = vmatprep.subr.bf16.mxu0 %v2129
    %2195 = vmatpush1.bf16.msra.mxu0 %v2128
    %2196 = vmatprep.subr.bf16.mxu0 %v2127
    %2197 = vmatpush1.bf16.msra.mxu0 %v2126
    %2198 = vmatprep.subr.bf16.mxu0 %v2125
    %2199 = vmatpush1.bf16.msra.mxu0 %v2124
    %2200 = vmatprep.subr.bf16.mxu0 %v2123
    %2201 = vmatpush1.bf16.msra.mxu0 %v2122
    %2202 = vmatprep.subr.bf16.mxu0 %v2153
    %2203 = vmatpush2.bf16.msra.mxu0 %v2152
    %2204 = vmatprep.subr.bf16.mxu0 %v2151
    %2205 = vmatpush2.bf16.msra.mxu0 %v2150
    %2206 = vmatprep.subr.bf16.mxu0 %v2149
    %2207 = vmatpush2.bf16.msra.mxu0 %v2148
    %2208 = vmatprep.subr.bf16.mxu0 %v2147
    %2209 = vmatpush2.bf16.msra.mxu0 %v2146
    %2210 = vmatprep.subr.bf16.mxu0 %v2145
    %2211 = vmatpush2.bf16.msra.mxu0 %v2144
    %2212 = vmatprep.subr.bf16.mxu0 %v2143
    %2213 = vmatpush2.bf16.msra.mxu0 %v2142
    %2214 = vmatprep.subr.bf16.mxu0 %v2141
    %2215 = vmatpush2.bf16.msra.mxu0 %v2140
    %2216 = vmatprep.subr.bf16.mxu0 %v2139
    %2217 = vmatpush2.bf16.msra.mxu0 %v2138
    %2218 = vmatprep.mubr.bf16.mxu0 %v2025
    %2219 = vmatmul.mubr.bf16.gmra.mxu0 %v2024
    %v2220 = vpop.f32.mrf.mxu0
    %v2221 = vadd.f32 0.0, %v2220
    %v2222 = vpop.f32.mrf.mxu0
    %v2223 = vadd.f32 0.0, %v2222
    %v2224 = vpop.f32.mrf.mxu0
    %v2225 = vpop.f32.mrf.mxu0
    %2226 = vdwg.mxu0
    %v2227 = vadd.f32 %v2022, %v2221
    %v2228 = vadd.f32 %v2023, %v2223
    %v2229 = vadd.f32 %v2227, %v1982
    %v2230 = vadd.f32 %v2228, %v1984
    %v2231 = vpack.c.bf16 %v2227, %v2227
    %v2232 = vpack.c.bf16 %v2228, %v2228
    %2233 = vmatprep.subr.bf16.mxu0 %v2137
    %2234 = vmatpush1.bf16.msra.mxu0 %v2136
    %2235 = vmatprep.subr.bf16.mxu0 %v2135
    %2236 = vmatpush1.bf16.msra.mxu0 %v2134
    %2237 = vmatprep.subr.bf16.mxu0 %v2133
    %2238 = vmatpush1.bf16.msra.mxu0 %v2132
    %2239 = vmatprep.subr.bf16.mxu0 %v2131
    %2240 = vmatpush1.bf16.msra.mxu0 %v2130
    %2241 = vmatprep.subr.bf16.mxu0 %v2129
    %2242 = vmatpush1.bf16.msra.mxu0 %v2128
    %2243 = vmatprep.subr.bf16.mxu0 %v2127
    %2244 = vmatpush1.bf16.msra.mxu0 %v2126
    %2245 = vmatprep.subr.bf16.mxu0 %v2125
    %2246 = vmatpush1.bf16.msra.mxu0 %v2124
    %2247 = vmatprep.subr.bf16.mxu0 %v2123
    %2248 = vmatpush1.bf16.msra.mxu0 %v2122
    %2249 = vmatprep.subr.bf16.mxu0 %v2153
    %2250 = vmatpush2.bf16.msra.mxu0 %v2152
    %2251 = vmatprep.subr.bf16.mxu0 %v2151
    %2252 = vmatpush2.bf16.msra.mxu0 %v2150
    %2253 = vmatprep.subr.bf16.mxu0 %v2149
    %2254 = vmatpush2.bf16.msra.mxu0 %v2148
    %2255 = vmatprep.subr.bf16.mxu0 %v2147
    %2256 = vmatpush2.bf16.msra.mxu0 %v2146
    %2257 = vmatprep.subr.bf16.mxu0 %v2145
    %2258 = vmatpush2.bf16.msra.mxu0 %v2144
    %2259 = vmatprep.subr.bf16.mxu0 %v2143
    %2260 = vmatpush2.bf16.msra.mxu0 %v2142
    %2261 = vmatprep.subr.bf16.mxu0 %v2141
    %2262 = vmatpush2.bf16.msra.mxu0 %v2140
    %2263 = vmatprep.subr.bf16.mxu0 %v2139
    %2264 = vmatpush2.bf16.msra.mxu0 %v2138
    %2265 = vmatprep.mubr.bf16.mxu0 %v2232
    %2266 = vmatmul.mubr.bf16.gmra.mxu0 %v2231
    %v2267 = vpop.f32.mrf.mxu0
    %v2268 = vadd.f32 0.0, %v2267
    %v2269 = vpop.f32.mrf.mxu0
    %v2270 = vadd.f32 0.0, %v2269
    %v2271 = vpop.f32.mrf.mxu0
    %v2272 = vpop.f32.mrf.mxu0
    %2273 = vdwg.mxu0
    %v2274 = vadd.f32 %v2229, %v2268
    %v2275 = vadd.f32 %v2230, %v2270
    %v2276 = vadd.f32 %v2274, %v1982
    %v2277 = vadd.f32 %v2275, %v1984
    %v2278 = vpack.c.bf16 %v2274, %v2274
    %v2279 = vpack.c.bf16 %v2275, %v2275
    %2280 = vmatprep.subr.bf16.mxu0 %v2137
    %2281 = vmatpush1.bf16.msra.mxu0 %v2136
    %2282 = vmatprep.subr.bf16.mxu0 %v2135
    %2283 = vmatpush1.bf16.msra.mxu0 %v2134
    %2284 = vmatprep.subr.bf16.mxu0 %v2133
    %2285 = vmatpush1.bf16.msra.mxu0 %v2132
    %2286 = vmatprep.subr.bf16.mxu0 %v2131
    %2287 = vmatpush1.bf16.msra.mxu0 %v2130
    %2288 = vmatprep.subr.bf16.mxu0 %v2129
    %2289 = vmatpush1.bf16.msra.mxu0 %v2128
    %2290 = vmatprep.subr.bf16.mxu0 %v2127
    %2291 = vmatpush1.bf16.msra.mxu0 %v2126
    %2292 = vmatprep.subr.bf16.mxu0 %v2125
    %2293 = vmatpush1.bf16.msra.mxu0 %v2124
    %2294 = vmatprep.subr.bf16.mxu0 %v2123
    %2295 = vmatpush1.bf16.msra.mxu0 %v2122
    %2296 = vmatprep.subr.bf16.mxu0 %v2153
    %2297 = vmatpush2.bf16.msra.mxu0 %v2152
    %2298 = vmatprep.subr.bf16.mxu0 %v2151
    %2299 = vmatpush2.bf16.msra.mxu0 %v2150
    %2300 = vmatprep.subr.bf16.mxu0 %v2149
    %2301 = vmatpush2.bf16.msra.mxu0 %v2148
    %2302 = vmatprep.subr.bf16.mxu0 %v2147
    %2303 = vmatpush2.bf16.msra.mxu0 %v2146
    %2304 = vmatprep.subr.bf16.mxu0 %v2145
    %2305 = vmatpush2.bf16.msra.mxu0 %v2144
    %2306 = vmatprep.subr.bf16.mxu0 %v2143
    %2307 = vmatpush2.bf16.msra.mxu0 %v2142
    %2308 = vmatprep.subr.bf16.mxu0 %v2141
    %2309 = vmatpush2.bf16.msra.mxu0 %v2140
    %2310 = vmatprep.subr.bf16.mxu0 %v2139
    %2311 = vmatpush2.bf16.msra.mxu0 %v2138
    %2312 = vmatprep.mubr.bf16.mxu0 %v2279
    %2313 = vmatmul.mubr.bf16.gmra.mxu0 %v2278
    %v2314 = vpop.f32.mrf.mxu0
    %v2315 = vadd.f32 0.0, %v2314
    %v2316 = vpop.f32.mrf.mxu0
    %v2317 = vadd.f32 0.0, %v2316
    %v2318 = vpop.f32.mrf.mxu0
    %v2319 = vpop.f32.mrf.mxu0
    %2320 = vdwg.mxu0
    %v2321 = vadd.f32 %v2276, %v2315
    %v2322 = vadd.f32 %v2277, %v2317
    %2323 = vst [vmem:[%s5] sm:$0xff] %v2321
    %2324 = vst [vmem:[%s5 + $0x8] sm:$0xff] %v2322
    // Predicated region
    $region30: #{regressor_forward.1} parent=1 // pred_check
      _
    $region31: #{regressor_forward.1} parent=1 // pred_check_branch
      %2326 = sbr.rel (0) target = $region33
    $region32: #{regressor_forward.1} parent=1 // pred_region
      _
    $region33: #{regressor_forward.1} parent=1 // pred_fallthru
      _
    // Predicated region
    $region34: #{regressor_forward.1} parent=1 // pred_check
      _
    $region35: #{regressor_forward.1} parent=1 // pred_check_branch
      %2328 = sbr.rel (0) target = $region37
    $region36: #{regressor_forward.1} parent=1 // pred_region
      _
    $region37: #{regressor_forward.1} parent=1 // pred_fallthru
      _
    %2329 = vsyncpa [#allocation3], 1
    %2330 = vsyncpa [#allocation5], 1

</llo_original>
